<compile_context>
chip_gen: v5e
topology: v5e:2x2
jax: 0.10.0
libtpu: 0.0.40
codegen_flags: <defaults>
</compile_context>

<pallas_src>
import functools

import jax
import jax.numpy as jnp
from jax.experimental import pallas as pl
from jax.experimental.pallas import tpu as pltpu

NUM_LAYERS = 2
OUT_CHANNELS = 20      # logical channel count C of the PyTorch module
C_PAD = 128            # channels padded to a full lane group (lane-dense)


# --------------------------------------------------------------------------- #
# Kernel
# --------------------------------------------------------------------------- #
def ggnn_kernel(x_ref, adj_ref, gru_w_ref, gru_b_ref, tail_w_ref, tail_b_ref,
                out_ref, *, n_valid):
    f32 = jnp.float32
    h = x_ref[...]            # [N, C_PAD], zero-padded beyond OUT_CHANNELS
    adj = adj_ref[...]        # [N, N]
    n_pad = h.shape[0]

    # GatedGraphConv: num_layers x (propagate(add) -> GRUCell), fused.
    for layer in range(NUM_LAYERS):
        # adj @ (h @ w_l) == (adj @ h) @ w_l ; w_l is folded into gru_w.
        agg = jnp.dot(adj, h, preferred_element_type=f32)             # [N, C_PAD]
        mh = jnp.concatenate([agg, h], axis=1)                        # [N, 2*C_PAD]
        g = (jnp.dot(mh, gru_w_ref[layer], preferred_element_type=f32)
             + gru_b_ref[layer])                                      # [N, 4*C_PAD]
        r = jax.nn.sigmoid(g[:, 0 * C_PAD:1 * C_PAD])
        z = jax.nn.sigmoid(g[:, 1 * C_PAD:2 * C_PAD])
        n = jnp.tanh(g[:, 2 * C_PAD:3 * C_PAD] + r * g[:, 3 * C_PAD:4 * C_PAD])
        h = (1.0 - z) * n + z * h

    # ReLU -> fused [Linear | Linear@attention] matmul.
    xr = jnp.maximum(h, 0.0)
    y = (jnp.dot(xr, tail_w_ref[...], preferred_element_type=f32)
         + tail_b_ref[...])                                           # [N, 2*C_PAD]
    x_lin = y[:, :C_PAD]                                              # linear(x)
    logits = y[:, C_PAD:C_PAD + 1]                                    # attention(linear(x)) [N, 1]

    # Mask padded node rows out of the softmax (static: only traced if padding).
    if n_valid < n_pad:
        row = jax.lax.broadcasted_iota(jnp.int32, logits.shape, 0)
        logits = jnp.where(row < n_valid, logits, -1e30)

    # softmax over nodes (dim=0) -> weighted sum
    logits = logits - jnp.max(logits, axis=0, keepdims=True)
    e = jnp.exp(logits)
    attn = e / jnp.sum(e, axis=0, keepdims=True)                      # [N, 1]
    out_ref[...] = jnp.sum(attn * x_lin, axis=0, keepdims=True)       # [1, C_PAD]


# --------------------------------------------------------------------------- #
# Parameters (logical, PyTorch-like) and lane-dense packing
# --------------------------------------------------------------------------- #
def init_params(key, in_channels, C=OUT_CHANNELS, num_layers=NUM_LAYERS):
    del in_channels
    keys = jax.random.split(key, 18)

    def mat(k, shape, scale=0.1):
        return (scale * jax.random.normal(k, shape)).astype(jnp.float32)

    return dict(
        w_layers=mat(keys[0], (num_layers, C, C)),
        # GRUCell weights (already transposed for right-multiplication) & biases
        w_ir=mat(keys[1], (C, C)), w_iz=mat(keys[2], (C, C)), w_in=mat(keys[3], (C, C)),
        w_hr=mat(keys[4], (C, C)), w_hz=mat(keys[5], (C, C)), w_hn=mat(keys[6], (C, C)),
        b_ir=mat(keys[7], (1, C)), b_iz=mat(keys[8], (1, C)), b_in=mat(keys[9], (1, C)),
        b_hr=mat(keys[10], (1, C)), b_hz=mat(keys[11], (1, C)), b_hn=mat(keys[12], (1, C)),
        lin_w=mat(keys[13], (C, C)), lin_b=mat(keys[14], (1, C)),
        attn_w=mat(keys[15], (C, 1)), attn_b=mat(keys[16], (1, 1)),
    )


def pack_params(p, C=OUT_CHANNELS, num_layers=NUM_LAYERS):
    """Pack / fuse weights into lane-dense slabs consumed by the kernel."""
    f32 = jnp.float32

    # Fused GRU gate weights: [L, 2*C_PAD, 4*C_PAD], biases [L, 1, 4*C_PAD].
    gw = jnp.zeros((num_layers, 2 * C_PAD, 4 * C_PAD), f32)
    gb = jnp.zeros((num_layers, 1, 4 * C_PAD), f32)
    for layer in range(num_layers):
        wl = p['w_layers'][layer]
        top = (wl @ p['w_ir'], wl @ p['w_iz'], wl @ p['w_in'], None)   # multiplies agg
        bot = (p['w_hr'], p['w_hz'], None, p['w_hn'])                  # multiplies h
        bias = (p['b_ir'] + p['b_hr'], p['b_iz'] + p['b_hz'], p['b_in'], p['b_hn'])
        for k in range(4):
            if top[k] is not None:
                gw = gw.at[layer, 0:C, k * C_PAD:k * C_PAD + C].set(top[k])
            if bot[k] is not None:
                gw = gw.at[layer, C_PAD:C_PAD + C, k * C_PAD:k * C_PAD + C].set(bot[k])
            gb = gb.at[layer, 0, k * C_PAD:k * C_PAD + C].set(bias[k][0])

    # Fused tail: [lin_w | lin_w @ attn_w] -> [C_PAD, 2*C_PAD], bias [1, 2*C_PAD].
    tw = jnp.zeros((C_PAD, 2 * C_PAD), f32)
    tw = tw.at[0:C, 0:C].set(p['lin_w'])
    tw = tw.at[0:C, C_PAD:C_PAD + 1].set(p['lin_w'] @ p['attn_w'])
    tb = jnp.zeros((1, 2 * C_PAD), f32)
    tb = tb.at[0, 0:C].set(p['lin_b'][0])
    tb = tb.at[0, C_PAD].set((p['lin_b'] @ p['attn_w'] + p['attn_b'])[0, 0])

    return dict(gru_w=gw, gru_b=gb, tail_w=tw, tail_b=tb)


# --------------------------------------------------------------------------- #
# Host-side graph preparation + pallas_call wrappers
# --------------------------------------------------------------------------- #
def build_adj(edge_index, n_pad):
    src, dst = edge_index[0], edge_index[1]
    return jnp.zeros((n_pad, n_pad), jnp.float32).at[dst, src].add(1.0)


def pad_features(x, n_pad):
    n, c_in = x.shape
    out = jnp.zeros((n_pad, C_PAD), jnp.float32)
    return out.at[:n, :c_in].set(x.astype(jnp.float32))


def ggnn_forward_batched(x_batch, adj_batch, packed, n_valid):
    """x_batch: [B, N_pad, C_PAD], adj_batch: [B, N_pad, N_pad] -> [B, OUT_CHANNELS]."""
    B, n_pad, _ = x_batch.shape
    kernel = functools.partial(ggnn_kernel, n_valid=n_valid)

    out = pl.pallas_call(
        kernel,
        out_shape=jax.ShapeDtypeStruct((B, 1, C_PAD), jnp.float32),
        grid=(B,),
        in_specs=[
            pl.BlockSpec((None, n_pad, C_PAD), lambda b: (b, 0, 0)),          # x per graph
            pl.BlockSpec((None, n_pad, n_pad), lambda b: (b, 0, 0)),          # adj per graph
            pl.BlockSpec((NUM_LAYERS, 2 * C_PAD, 4 * C_PAD), lambda b: (0, 0, 0)),  # gru_w shared
            pl.BlockSpec((NUM_LAYERS, 1, 4 * C_PAD), lambda b: (0, 0, 0)),    # gru_b shared
            pl.BlockSpec((C_PAD, 2 * C_PAD), lambda b: (0, 0)),               # tail_w shared
            pl.BlockSpec((1, 2 * C_PAD), lambda b: (0, 0)),                   # tail_b shared
        ],
        out_specs=pl.BlockSpec((None, 1, C_PAD), lambda b: (b, 0, 0)),        # lane-dense output
        compiler_params=pltpu.CompilerParams(
            dimension_semantics=("parallel",)),   # shards graphs across TCs on v7x
    )(x_batch, adj_batch, packed['gru_w'], packed['gru_b'],
      packed['tail_w'], packed['tail_b'])

    return out[:, 0, :OUT_CHANNELS]


def ggnn_forward(x, edge_index, params):
    """Single-graph API matching the PyTorch module: x [N, Cin], edge_index [2, E] -> [1, C]."""
    n = x.shape[0]
    n_pad = max(8, ((n + 7) // 8) * 8)
    packed = pack_params(params)
    xb = pad_features(x, n_pad)[None]
    adjb = build_adj(edge_index, n_pad)[None]
    return ggnn_forward_batched(xb, adjb, packed, n_valid=n)[0:1]


# --------------------------------------------------------------------------- #
# Pure-JAX reference (identical semantics to the PyTorch module)
# --------------------------------------------------------------------------- #
def ggnn_ref(x, edge_index, p):
    N = x.shape[0]
    C = OUT_CHANNELS
    h = jnp.zeros((N, C), jnp.float32).at[:, :x.shape[1]].set(x.astype(jnp.float32))
    src, dst = edge_index[0], edge_index[1]
    adj = jnp.zeros((N, N), jnp.float32).at[dst, src].add(1.0)
    for layer in range(NUM_LAYERS):
        m = adj @ (h @ p['w_layers'][layer])
        r = jax.nn.sigmoid(m @ p['w_ir'] + p['b_ir'] + h @ p['w_hr'] + p['b_hr'])
        z = jax.nn.sigmoid(m @ p['w_iz'] + p['b_iz'] + h @ p['w_hz'] + p['b_hz'])
        n = jnp.tanh(m @ p['w_in'] + p['b_in'] + r * (h @ p['w_hn'] + p['b_hn']))
        h = (1.0 - z) * n + z * h
    xx = jnp.maximum(h, 0.0)
    xx = xx @ p['lin_w'] + p['lin_b']
    logits = xx @ p['attn_w'] + p['attn_b']
    attn = jax.nn.softmax(logits, axis=0)
    return jnp.sum(attn * xx, axis=0, keepdims=True)


# --------------------------------------------------------------------------- #
if __name__ == "__main__":
    key = jax.random.PRNGKey(0)
    kx, ke1, ke2, kp = jax.random.split(key, 4)

    B, N, in_channels, E = 4, 8, 16, 24
    xs = jax.random.normal(kx, (B, N, in_channels), dtype=jnp.float32)
    srcs = jax.random.randint(ke1, (B, E), 0, N)
    dsts = jax.random.randint(ke2, (B, E), 0, N)
    edge_indices = [jnp.stack([srcs[b], dsts[b]]) for b in range(B)]

    params = init_params(kp, in_channels)
    packed = pack_params(params)

    # Batched path (one pallas_call, grid over graphs).
    x_batch = jnp.stack([pad_features(xs[b], N) for b in range(B)])
    adj_batch = jnp.stack([build_adj(edge_indices[b], N) for b in range(B)])
    out = ggnn_forward_batched(x_batch, adj_batch, packed, n_valid=N)   # [B, C]
    out = jax.block_until_ready(out)
    assert out.shape == (B, OUT_CHANNELS)

    ok = True
    for b in range(B):
        ref = ggnn_ref(xs[b], edge_indices[b], params)                  # [1, C]
        ok = ok and bool(jnp.allclose(out[b:b + 1], ref, atol=1e-4, rtol=1e-4))

    # Single-graph path (matches the PyTorch module signature).
    single = ggnn_forward(xs[0], edge_indices[0], params)
    single = jax.block_until_ready(single)
    ref0 = ggnn_ref(xs[0], edge_indices[0], params)
    ok = ok and single.shape == (1, OUT_CHANNELS)
    ok = ok and bool(jnp.allclose(single, ref0, atol=1e-4, rtol=1e-4))

    assert ok, (out, single)
    print("KERNEL_OK")
</pallas_src>

<mosaic_0001>
module attributes {stable_mosaic.version = 11 : i64} {
  func.func @ggnn_kernel(%arg0: i32, %arg1: memref<1x8x128xf32, #tpu.memory_space<vmem>>, %arg2: memref<1x8x8xf32, #tpu.memory_space<vmem>>, %arg3: memref<2x256x512xf32, #tpu.memory_space<vmem>>, %arg4: memref<2x1x512xf32, #tpu.memory_space<vmem>>, %arg5: memref<128x256xf32, #tpu.memory_space<vmem>>, %arg6: memref<1x256xf32, #tpu.memory_space<vmem>>, %arg7: memref<1x1x128xf32, #tpu.memory_space<vmem>>) attributes {dimension_semantics = [#tpu.dimension_semantics<parallel>], iteration_bounds = array<i64: 4>, scalar_prefetch = 0 : i64, scratch_operands = 0 : i64, tpu.core_type = #tpu.core_type<tc>, window_params = [{transform_indices = @transform_0, window_bounds = array<i64: 1, 8, 128>}, {transform_indices = @transform_1, window_bounds = array<i64: 1, 8, 8>}, {pipeline_mode = #tpu.pipeline_mode<synchronous>, transform_indices = @transform_2, window_bounds = array<i64: 2, 256, 512>}, {pipeline_mode = #tpu.pipeline_mode<synchronous>, transform_indices = @transform_3, window_bounds = array<i64: 2, 1, 512>}, {pipeline_mode = #tpu.pipeline_mode<synchronous>, transform_indices = @transform_4, window_bounds = array<i64: 128, 256>}, {pipeline_mode = #tpu.pipeline_mode<synchronous>, transform_indices = @transform_5, window_bounds = array<i64: 1, 256>}, {transform_indices = @transform_6, window_bounds = array<i64: 1, 1, 128>}]} {
    %c0 = arith.constant 0 : index
    %c0_0 = arith.constant 0 : index
    %c0_1 = arith.constant 0 : index
    %0 = vector.load %arg1[%c0, %c0_0, %c0_1] : memref<1x8x128xf32, #tpu.memory_space<vmem>>, vector<1x8x128xf32>
    %1 = vector.shape_cast %0 : vector<1x8x128xf32> to vector<8x128xf32>
    %c0_2 = arith.constant 0 : index
    %c0_3 = arith.constant 0 : index
    %c0_4 = arith.constant 0 : index
    %2 = vector.load %arg2[%c0_2, %c0_3, %c0_4] : memref<1x8x8xf32, #tpu.memory_space<vmem>>, vector<1x8x8xf32>
    %3 = vector.shape_cast %2 : vector<1x8x8xf32> to vector<8x8xf32>
    %cst = arith.constant dense<0.000000e+00> : vector<8x128xf32>
    %4 = tpu.matmul %3, %1, %cst {dimension_numbers = #tpu.dot_dimension_numbers<[1], [0], [0], [1], [0, 0, 1, 1], [], []>} : vector<8x8xf32>, vector<8x128xf32>, vector<8x128xf32> -> vector<8x128xf32>
    %5 = tpu.concatenate %4, %1 in 1 : vector<8x128xf32>, vector<8x128xf32> -> vector<8x256xf32>
    %c0_5 = arith.constant 0 : index
    %c0_6 = arith.constant 0 : index
    %c0_7 = arith.constant 0 : index
    %6 = vector.load %arg3[%c0_5, %c0_6, %c0_7] : memref<2x256x512xf32, #tpu.memory_space<vmem>>, vector<1x256x512xf32>
    %7 = vector.shape_cast %6 : vector<1x256x512xf32> to vector<256x512xf32>
    %cst_8 = arith.constant dense<0.000000e+00> : vector<8x512xf32>
    %8 = tpu.matmul %5, %7, %cst_8 {dimension_numbers = #tpu.dot_dimension_numbers<[1], [0], [0], [1], [0, 0, 1, 1], [], []>} : vector<8x256xf32>, vector<256x512xf32>, vector<8x512xf32> -> vector<8x512xf32>
    %c0_9 = arith.constant 0 : index
    %c0_10 = arith.constant 0 : index
    %c0_11 = arith.constant 0 : index
    %9 = vector.load %arg4[%c0_9, %c0_10, %c0_11] : memref<2x1x512xf32, #tpu.memory_space<vmem>>, vector<1x1x512xf32>
    %10 = vector.shape_cast %9 : vector<1x1x512xf32> to vector<1x512xf32>
    %11 = vector.broadcast %10 : vector<1x512xf32> to vector<8x512xf32>
    %12 = arith.addf %8, %11 : vector<8x512xf32>
    %13 = vector.extract_strided_slice %12 {offsets = [0, 0], sizes = [8, 128], strides = [1, 1]} : vector<8x512xf32> to vector<8x128xf32>
    %14 = arith.negf %13 : vector<8x128xf32>
    %15 = math.exp %14 : vector<8x128xf32>
    %cst_12 = arith.constant 1.000000e+00 : f32
    %16 = vector.broadcast %cst_12 : f32 to vector<8x128xf32>
    %17 = arith.addf %16, %15 : vector<8x128xf32>
    %18 = arith.divf %16, %17 : vector<8x128xf32>
    %19 = vector.extract_strided_slice %12 {offsets = [0, 128], sizes = [8, 128], strides = [1, 1]} : vector<8x512xf32> to vector<8x128xf32>
    %20 = arith.negf %19 : vector<8x128xf32>
    %21 = math.exp %20 : vector<8x128xf32>
    %cst_13 = arith.constant 1.000000e+00 : f32
    %22 = vector.broadcast %cst_13 : f32 to vector<8x128xf32>
    %23 = arith.addf %22, %21 : vector<8x128xf32>
    %24 = arith.divf %22, %23 : vector<8x128xf32>
    %25 = vector.extract_strided_slice %12 {offsets = [0, 256], sizes = [8, 128], strides = [1, 1]} : vector<8x512xf32> to vector<8x128xf32>
    %26 = vector.extract_strided_slice %12 {offsets = [0, 384], sizes = [8, 128], strides = [1, 1]} : vector<8x512xf32> to vector<8x128xf32>
    %27 = arith.mulf %18, %26 : vector<8x128xf32>
    %28 = arith.addf %25, %27 : vector<8x128xf32>
    %29 = math.tanh %28 : vector<8x128xf32>
    %cst_14 = arith.constant 1.000000e+00 : f32
    %30 = vector.broadcast %cst_14 : f32 to vector<8x128xf32>
    %31 = arith.subf %30, %24 : vector<8x128xf32>
    %32 = arith.mulf %31, %29 : vector<8x128xf32>
    %33 = arith.mulf %24, %1 : vector<8x128xf32>
    %34 = arith.addf %32, %33 : vector<8x128xf32>
    %cst_15 = arith.constant dense<0.000000e+00> : vector<8x128xf32>
    %35 = tpu.matmul %3, %34, %cst_15 {dimension_numbers = #tpu.dot_dimension_numbers<[1], [0], [0], [1], [0, 0, 1, 1], [], []>} : vector<8x8xf32>, vector<8x128xf32>, vector<8x128xf32> -> vector<8x128xf32>
    %36 = tpu.concatenate %35, %34 in 1 : vector<8x128xf32>, vector<8x128xf32> -> vector<8x256xf32>
    %c1 = arith.constant 1 : index
    %c0_16 = arith.constant 0 : index
    %c0_17 = arith.constant 0 : index
    %37 = vector.load %arg3[%c1, %c0_16, %c0_17] : memref<2x256x512xf32, #tpu.memory_space<vmem>>, vector<1x256x512xf32>
    %38 = vector.shape_cast %37 : vector<1x256x512xf32> to vector<256x512xf32>
    %cst_18 = arith.constant dense<0.000000e+00> : vector<8x512xf32>
    %39 = tpu.matmul %36, %38, %cst_18 {dimension_numbers = #tpu.dot_dimension_numbers<[1], [0], [0], [1], [0, 0, 1, 1], [], []>} : vector<8x256xf32>, vector<256x512xf32>, vector<8x512xf32> -> vector<8x512xf32>
    %c1_19 = arith.constant 1 : index
    %c0_20 = arith.constant 0 : index
    %c0_21 = arith.constant 0 : index
    %40 = vector.load %arg4[%c1_19, %c0_20, %c0_21] : memref<2x1x512xf32, #tpu.memory_space<vmem>>, vector<1x1x512xf32>
    %41 = vector.shape_cast %40 : vector<1x1x512xf32> to vector<1x512xf32>
    %42 = vector.broadcast %41 : vector<1x512xf32> to vector<8x512xf32>
    %43 = arith.addf %39, %42 : vector<8x512xf32>
    %44 = vector.extract_strided_slice %43 {offsets = [0, 0], sizes = [8, 128], strides = [1, 1]} : vector<8x512xf32> to vector<8x128xf32>
    %45 = arith.negf %44 : vector<8x128xf32>
    %46 = math.exp %45 : vector<8x128xf32>
    %cst_22 = arith.constant 1.000000e+00 : f32
    %47 = vector.broadcast %cst_22 : f32 to vector<8x128xf32>
    %48 = arith.addf %47, %46 : vector<8x128xf32>
    %49 = arith.divf %47, %48 : vector<8x128xf32>
    %50 = vector.extract_strided_slice %43 {offsets = [0, 128], sizes = [8, 128], strides = [1, 1]} : vector<8x512xf32> to vector<8x128xf32>
    %51 = arith.negf %50 : vector<8x128xf32>
    %52 = math.exp %51 : vector<8x128xf32>
    %cst_23 = arith.constant 1.000000e+00 : f32
    %53 = vector.broadcast %cst_23 : f32 to vector<8x128xf32>
    %54 = arith.addf %53, %52 : vector<8x128xf32>
    %55 = arith.divf %53, %54 : vector<8x128xf32>
    %56 = vector.extract_strided_slice %43 {offsets = [0, 256], sizes = [8, 128], strides = [1, 1]} : vector<8x512xf32> to vector<8x128xf32>
    %57 = vector.extract_strided_slice %43 {offsets = [0, 384], sizes = [8, 128], strides = [1, 1]} : vector<8x512xf32> to vector<8x128xf32>
    %58 = arith.mulf %49, %57 : vector<8x128xf32>
    %59 = arith.addf %56, %58 : vector<8x128xf32>
    %60 = math.tanh %59 : vector<8x128xf32>
    %cst_24 = arith.constant 1.000000e+00 : f32
    %61 = vector.broadcast %cst_24 : f32 to vector<8x128xf32>
    %62 = arith.subf %61, %55 : vector<8x128xf32>
    %63 = arith.mulf %62, %60 : vector<8x128xf32>
    %64 = arith.mulf %55, %34 : vector<8x128xf32>
    %65 = arith.addf %63, %64 : vector<8x128xf32>
    %cst_25 = arith.constant 0.000000e+00 : f32
    %66 = vector.broadcast %cst_25 : f32 to vector<8x128xf32>
    %67 = arith.maximumf %65, %66 : vector<8x128xf32>
    %c0_26 = arith.constant 0 : index
    %c0_27 = arith.constant 0 : index
    %68 = vector.load %arg5[%c0_26, %c0_27] : memref<128x256xf32, #tpu.memory_space<vmem>>, vector<128x256xf32>
    %cst_28 = arith.constant dense<0.000000e+00> : vector<8x256xf32>
    %69 = tpu.matmul %67, %68, %cst_28 {dimension_numbers = #tpu.dot_dimension_numbers<[1], [0], [0], [1], [0, 0, 1, 1], [], []>} : vector<8x128xf32>, vector<128x256xf32>, vector<8x256xf32> -> vector<8x256xf32>
    %c0_29 = arith.constant 0 : index
    %c0_30 = arith.constant 0 : index
    %70 = vector.load %arg6[%c0_29, %c0_30] : memref<1x256xf32, #tpu.memory_space<vmem>>, vector<1x256xf32>
    %71 = vector.broadcast %70 : vector<1x256xf32> to vector<8x256xf32>
    %72 = arith.addf %69, %71 : vector<8x256xf32>
    %73 = vector.extract_strided_slice %72 {offsets = [0, 0], sizes = [8, 128], strides = [1, 1]} : vector<8x256xf32> to vector<8x128xf32>
    %74 = vector.extract_strided_slice %72 {offsets = [0, 128], sizes = [8, 1], strides = [1, 1]} : vector<8x256xf32> to vector<8x1xf32>
    %cst_31 = arith.constant dense<0xFF800000> : vector<1xf32>
    %75 = vector.multi_reduction <maximumf>, %74, %cst_31 [0] : vector<8x1xf32> to vector<1xf32>
    %76 = vector.shape_cast %75 : vector<1xf32> to vector<1x1xf32>
    %77 = vector.broadcast %76 : vector<1x1xf32> to vector<8x1xf32>
    %78 = arith.subf %74, %77 : vector<8x1xf32>
    %79 = math.exp %78 : vector<8x1xf32>
    %cst_32 = arith.constant dense<0.000000e+00> : vector<1xf32>
    %80 = vector.multi_reduction <add>, %79, %cst_32 [0] : vector<8x1xf32> to vector<1xf32>
    %81 = vector.shape_cast %80 : vector<1xf32> to vector<1x1xf32>
    %82 = vector.broadcast %81 : vector<1x1xf32> to vector<8x1xf32>
    %83 = arith.divf %79, %82 : vector<8x1xf32>
    %84 = vector.broadcast %83 : vector<8x1xf32> to vector<8x128xf32>
    %85 = arith.mulf %84, %73 : vector<8x128xf32>
    %cst_33 = arith.constant dense<0.000000e+00> : vector<128xf32>
    %86 = vector.multi_reduction <add>, %85, %cst_33 [0] : vector<8x128xf32> to vector<128xf32>
    %87 = vector.shape_cast %86 : vector<128xf32> to vector<1x128xf32>
    %c0_34 = arith.constant 0 : index
    %c0_35 = arith.constant 0 : index
    %c0_36 = arith.constant 0 : index
    %88 = vector.load %arg7[%c0_34, %c0_35, %c0_36] : memref<1x1x128xf32, #tpu.memory_space<vmem>>, vector<1x1x128xf32>
    %89 = vector.shape_cast %88 : vector<1x1x128xf32> to vector<1x128xf32>
    %90 = vector.shape_cast %87 : vector<1x128xf32> to vector<1x1x128xf32>
    tpu.vector_store %arg7[%c0_34, %c0_35, %c0_36], %90 {strides = array<i32>} : memref<1x1x128xf32, #tpu.memory_space<vmem>>, vector<1x1x128xf32>,
    return
  }
  func.func @transform_0(%arg0: i32) -> (i32, i32, i32) {
    %c0_i32 = arith.constant 0 : i32
    %c0_i32_0 = arith.constant 0 : i32
    %c0_i32_1 = arith.constant 0 : i32
    return %arg0, %c0_i32, %c0_i32_0 : i32, i32, i32
  }
  func.func @transform_1(%arg0: i32) -> (i32, i32, i32) {
    %c0_i32 = arith.constant 0 : i32
    %c0_i32_0 = arith.constant 0 : i32
    %c0_i32_1 = arith.constant 0 : i32
    return %arg0, %c0_i32, %c0_i32_0 : i32, i32, i32
  }
  func.func @transform_2(%arg0: i32) -> (i32, i32, i32) {
    %c0_i32 = arith.constant 0 : i32
    %c0_i32_0 = arith.constant 0 : i32
    %c0_i32_1 = arith.constant 0 : i32
    %c0_i32_2 = arith.constant 0 : i32
    return %c0_i32, %c0_i32_0, %c0_i32_1 : i32, i32, i32
  }
  func.func @transform_3(%arg0: i32) -> (i32, i32, i32) {
    %c0_i32 = arith.constant 0 : i32
    %c0_i32_0 = arith.constant 0 : i32
    %c0_i32_1 = arith.constant 0 : i32
    %c0_i32_2 = arith.constant 0 : i32
    return %c0_i32, %c0_i32_0, %c0_i32_1 : i32, i32, i32
  }
  func.func @transform_4(%arg0: i32) -> (i32, i32) {
    %c0_i32 = arith.constant 0 : i32
    %c0_i32_0 = arith.constant 0 : i32
    %c0_i32_1 = arith.constant 0 : i32
    return %c0_i32, %c0_i32_0 : i32, i32
  }
  func.func @transform_5(%arg0: i32) -> (i32, i32) {
    %c0_i32 = arith.constant 0 : i32
    %c0_i32_0 = arith.constant 0 : i32
    %c0_i32_1 = arith.constant 0 : i32
    return %c0_i32, %c0_i32_0 : i32, i32
  }
  func.func @transform_6(%arg0: i32) -> (i32, i32, i32) {
    %c0_i32 = arith.constant 0 : i32
    %c0_i32_0 = arith.constant 0 : i32
    %c0_i32_1 = arith.constant 0 : i32
    return %arg0, %c0_i32, %c0_i32_0 : i32, i32, i32
  }
}

</mosaic_0001>

<llo_original>
// kernel: tpu_custom_call.1
$region0: #{tpu_custom_call.1}
  #allocation0 [shape = 'u32[]', space=smem, size = 0x4, offset = 0x4, fixed_abs, tag = 'smem constant byte address 0x4 - core index']
  #allocation1 [shape = 'u32[72,128]{1,0:T(1,128)}', space=vmem, size = 0x9000, scoped, tag = 'internal scratch']
  %s0 = inlined_call_operand.hbm [shape: f32[4,8,128], index: 0, kind: input, shape index: {}]
  %s1 = inlined_call_operand.hbm [shape: f32[4,8,8], index: 1, kind: input, shape index: {}]
  %s2 = inlined_call_operand.hbm [shape: f32[2,256,512], index: 2, kind: input, shape index: {}]
  %s3 = inlined_call_operand.hbm [shape: f32[2,1,512], index: 3, kind: input, shape index: {}]
  %s4 = inlined_call_operand.hbm [shape: f32[128,256], index: 4, kind: input, shape index: {}]
  %s5 = inlined_call_operand.vmem [shape: f32[1,256], index: 5, kind: input, shape index: {}]
  %s6 = inlined_call_operand.hbm [shape: f32[4,1,128], index: 6, kind: output, shape index: {}]
  %s7 = sld [smem:[#allocation0]]
  $region77: #{tpu_custom_call.1} parent=0
    _
  %s9 = ssub.s32 1, %s7
  %s10 = scalar_select 0, %s9, %s7
  $region1: #{tpu_custom_call.1} parent=0
    #allocation2 [shape = 'u8[8192]{0}', space=vmem, size = 0x2000, scoped, tag = 'input window, operand 0']
    #allocation3 [shape = 's32[2]{0}', space=sflag, size = 0x8, scoped, tag = 'scoped memory for tpu_custom_call.1']
    #allocation4 [shape = 's32[2]{0}', space=sflag, size = 0x8, scoped, tag = 'scoped memory for tpu_custom_call.1']
    #allocation5 [shape = 'u8[8192]{0}', space=vmem, size = 0x2000, scoped, tag = 'input window, operand 1']
    #allocation6 [shape = 's32[2]{0}', space=sflag, size = 0x8, scoped, tag = 'scoped memory for tpu_custom_call.1']
    #allocation7 [shape = 'u8[1048576]{0}', space=vmem, size = 0x100000, scoped, tag = 'input window, operand 2, single buffered']
    #allocation8 [shape = 'u8[4096]{0}', space=vmem, size = 0x1000, scoped, tag = 'input window, operand 3, single buffered']
    #allocation9 [shape = 's32[1]{0}', space=sflag, size = 0x4, scoped, tag = 'scoped memory for tpu_custom_call.1']
    #allocation10 [shape = 'u8[131072]{0}', space=vmem, size = 0x20000, scoped, tag = 'input window, operand 4, single buffered']
    #allocation11 [shape = 'u8[1024]{0}', space=vmem, size = 0x400, scoped, tag = 'output window, operand 0']
    %11 = vsyncpa [#allocation3], 0
    %s12 = scalar_lea.sflag [#allocation3], 1
    %13 = vsyncpa %s12, 0
    %14 = vsyncpa [#allocation6], 0
    %s15 = scalar_lea.sflag [#allocation6], 1
    %16 = vsyncpa %s15, 0
    %17 = vsyncpa [#allocation9], 0
    %18 = vsyncpa [#allocation4], 0
    %s19 = scalar_lea.sflag [#allocation4], 1
    %20 = vsyncpa %s19, 0
    loop: start=0, step=1, limit=6
    $region2: #{tpu_custom_call.1} parent=1 // loop_pre_header
      _
    $region3: #{tpu_custom_call.1} parent=1 // loop_header
      %s22 = sphi 0, %s26
      %p23 = scmp.ge.s32.totalorder %s22, 6
      %s32 = sphi 0, %s34
      %s35 = sphi 0, %s32
      %s36 = sphi 0, %s35
      %s52 = sphi 0, %s36
      %s58 = sphi 0, %s60
      %s61 = sphi 0, %s58
      %s62 = sphi 0, %s61
      %s78 = sphi 0, %s62
      %s82 = sphi 0, %s82
      %s84 = sphi 0, %s82
      %s85 = sphi 0, %s84
      %s99 = sphi 0, %s85
      %s103 = sphi 0, %s103
      %s105 = sphi 0, %s103
      %s106 = sphi 0, %s105
      %s120 = sphi 0, %s106
      %s124 = sphi 0, %s124
      %s126 = sphi 0, %s124
      %s127 = sphi 0, %s126
      %s141 = sphi 0, %s127
      %s145 = sphi 0, %s145
      %s147 = sphi 0, %s145
      %s148 = sphi 0, %s147
      %s162 = sphi 0, %s148
      %s168 = sphi 0, %s170
      %s171 = sphi 0, %s168
      %s172 = sphi 0, %s171
      %s188 = sphi 0, %s172
    $region4: #{tpu_custom_call.1} parent=1 // loop_header_branch
      %25 = sbr.rel (%p23) target = $region8
    $region5: #{tpu_custom_call.1} parent=1 // loop_body
      %s27 = ssub.s32 %s22, 1
      %s28 = ssub.s32 %s22, 2
      %s29 = sadd.s32 %s22, 1
      %s30 = ssub.s32 %s22, %s29
      %p31 = scmp.eq.s32.totalorder %s30, 0
      %s33 = sadd.s32 %s32, 1
      %s34 = scalar_select %p31, %s32, %s33
      %p37 = pneg %p31
      %p38 = scmp.eq.s32.totalorder %s22, 3
      %p39 = por %p37, %p38
      %p40 = scmp.ne.s32.totalorder %s32, %s35
      %p41 = scmp.eq.s32.totalorder %s22, 0
      %p42 = por %p40, %p41
      %p43 = scmp.ne.s32.totalorder %s32, %s35
      %p44 = scmp.eq.s32.totalorder %s27, 3
      %p45 = por %p43, %p44
      %p46 = scmp.ne.s32.totalorder %s35, %s36
      %p47 = scmp.eq.s32.totalorder %s27, 0
      %p48 = por %p46, %p47
      %p49 = scmp.ne.s32.totalorder %s35, %s36
      %p50 = scmp.eq.s32.totalorder %s28, 3
      %p51 = por %p49, %p50
      %p53 = scmp.ne.s32.totalorder %s36, %s52
      %p54 = scmp.eq.s32.totalorder %s28, 0
      %p55 = por %p53, %p54
      %s56 = ssub.s32 %s22, %s29
      %p57 = scmp.eq.s32.totalorder %s56, 0
      %s59 = sadd.s32 %s58, 1
      %s60 = scalar_select %p57, %s58, %s59
      %p63 = pneg %p57
      %p64 = scmp.eq.s32.totalorder %s22, 3
      %p65 = por %p63, %p64
      %p66 = scmp.ne.s32.totalorder %s58, %s61
      %p67 = scmp.eq.s32.totalorder %s22, 0
      %p68 = por %p66, %p67
      %p69 = scmp.ne.s32.totalorder %s58, %s61
      %p70 = scmp.eq.s32.totalorder %s27, 3
      %p71 = por %p69, %p70
      %p72 = scmp.ne.s32.totalorder %s61, %s62
      %p73 = scmp.eq.s32.totalorder %s27, 0
      %p74 = por %p72, %p73
      %p75 = scmp.ne.s32.totalorder %s61, %s62
      %p76 = scmp.eq.s32.totalorder %s28, 3
      %p77 = por %p75, %p76
      %p79 = scmp.ne.s32.totalorder %s62, %s78
      %p80 = scmp.eq.s32.totalorder %s28, 0
      %p81 = por %p79, %p80
      %s83 = sadd.s32 %s82, 1
      %p86 = scmp.eq.s32.totalorder %s22, 3
      %p87 = scmp.ne.s32.totalorder %s82, %s84
      %p88 = scmp.eq.s32.totalorder %s22, 0
      %p89 = por %p87, %p88
      %p90 = scmp.ne.s32.totalorder %s82, %s84
      %p91 = scmp.eq.s32.totalorder %s27, 3
      %p92 = por %p90, %p91
      %p93 = scmp.ne.s32.totalorder %s84, %s85
      %p94 = scmp.eq.s32.totalorder %s27, 0
      %p95 = por %p93, %p94
      %p96 = scmp.ne.s32.totalorder %s84, %s85
      %p97 = scmp.eq.s32.totalorder %s28, 3
      %p98 = por %p96, %p97
      %p100 = scmp.ne.s32.totalorder %s85, %s99
      %p101 = scmp.eq.s32.totalorder %s28, 0
      %p102 = por %p100, %p101
      %s104 = sadd.s32 %s103, 1
      %p107 = scmp.eq.s32.totalorder %s22, 3
      %p108 = scmp.ne.s32.totalorder %s103, %s105
      %p109 = scmp.eq.s32.totalorder %s22, 0
      %p110 = por %p108, %p109
      %p111 = scmp.ne.s32.totalorder %s103, %s105
      %p112 = scmp.eq.s32.totalorder %s27, 3
      %p113 = por %p111, %p112
      %p114 = scmp.ne.s32.totalorder %s105, %s106
      %p115 = scmp.eq.s32.totalorder %s27, 0
      %p116 = por %p114, %p115
      %p117 = scmp.ne.s32.totalorder %s105, %s106
      %p118 = scmp.eq.s32.totalorder %s28, 3
      %p119 = por %p117, %p118
      %p121 = scmp.ne.s32.totalorder %s106, %s120
      %p122 = scmp.eq.s32.totalorder %s28, 0
      %p123 = por %p121, %p122
      %s125 = sadd.s32 %s124, 1
      %p128 = scmp.eq.s32.totalorder %s22, 3
      %p129 = scmp.ne.s32.totalorder %s124, %s126
      %p130 = scmp.eq.s32.totalorder %s22, 0
      %p131 = por %p129, %p130
      %p132 = scmp.ne.s32.totalorder %s124, %s126
      %p133 = scmp.eq.s32.totalorder %s27, 3
      %p134 = por %p132, %p133
      %p135 = scmp.ne.s32.totalorder %s126, %s127
      %p136 = scmp.eq.s32.totalorder %s27, 0
      %p137 = por %p135, %p136
      %p138 = scmp.ne.s32.totalorder %s126, %s127
      %p139 = scmp.eq.s32.totalorder %s28, 3
      %p140 = por %p138, %p139
      %p142 = scmp.ne.s32.totalorder %s127, %s141
      %p143 = scmp.eq.s32.totalorder %s28, 0
      %p144 = por %p142, %p143
      %s146 = sadd.s32 %s145, 1
      %p149 = scmp.eq.s32.totalorder %s22, 3
      %p150 = scmp.ne.s32.totalorder %s145, %s147
      %p151 = scmp.eq.s32.totalorder %s22, 0
      %p152 = por %p150, %p151
      %p153 = scmp.ne.s32.totalorder %s145, %s147
      %p154 = scmp.eq.s32.totalorder %s27, 3
      %p155 = por %p153, %p154
      %p156 = scmp.ne.s32.totalorder %s147, %s148
      %p157 = scmp.eq.s32.totalorder %s27, 0
      %p158 = por %p156, %p157
      %p159 = scmp.ne.s32.totalorder %s147, %s148
      %p160 = scmp.eq.s32.totalorder %s28, 3
      %p161 = por %p159, %p160
      %p163 = scmp.ne.s32.totalorder %s148, %s162
      %p164 = scmp.eq.s32.totalorder %s28, 0
      %p165 = por %p163, %p164
      %s166 = ssub.s32 %s22, %s29
      %p167 = scmp.eq.s32.totalorder %s166, 0
      %s169 = sadd.s32 %s168, 1
      %s170 = scalar_select %p167, %s168, %s169
      %p173 = pneg %p167
      %p174 = scmp.eq.s32.totalorder %s22, 3
      %p175 = por %p173, %p174
      %p176 = scmp.ne.s32.totalorder %s168, %s171
      %p177 = scmp.eq.s32.totalorder %s22, 0
      %p178 = por %p176, %p177
      %p179 = scmp.ne.s32.totalorder %s168, %s171
      %p180 = scmp.eq.s32.totalorder %s27, 3
      %p181 = por %p179, %p180
      %p182 = scmp.ne.s32.totalorder %s171, %s172
      %p183 = scmp.eq.s32.totalorder %s27, 0
      %p184 = por %p182, %p183
      %p185 = scmp.ne.s32.totalorder %s171, %s172
      %p186 = scmp.eq.s32.totalorder %s28, 3
      %p187 = por %p185, %p186
      %p189 = scmp.ne.s32.totalorder %s172, %s188
      %p190 = scmp.eq.s32.totalorder %s28, 0
      %p191 = por %p189, %p190
      %p192 = scmp.le.s32.totalorder 1, %s22
      %p193 = scmp.lt.s32.totalorder %s22, 5
      %p194 = pnand %p192, %p193
      %p195 = pneg %p194
      // Predicated region
      $region9: #{tpu_custom_call.1} parent=5 // pred_check
        _
      $region10: #{tpu_custom_call.1} parent=5 // pred_check_branch
        %197 = sbr.rel (%p194) target = $region12
      $region11: #{tpu_custom_call.1} parent=5 // pred_region
        %s198 = ssub.s32 %s22, 1
        // Predicated region
        $region13: #{tpu_custom_call.1} parent=11 // pred_check
          %p199 = pneg %p95
        $region14: #{tpu_custom_call.1} parent=11 // pred_check_branch
          %201 = sbr.rel (%p199) target = $region16
        $region15: #{tpu_custom_call.1} parent=11 // pred_region
          %203 = vsyncadd [#allocation6], 0
          %s204 = sshll.u32 %s2, 4
          %s205 = int_to_ptr.hbm [resolvable:$true] %s204
          %s206 = sshll.u32 [#allocation7], 4
          %s207 = int_to_ptr.vmem [resolvable:$true] %s206
          %212 = dma.hbm_to_vmem [thread:$0]  %s205, 32768, %s207, [#allocation6], 512, 512, 32
        $region16: #{tpu_custom_call.1} parent=11 // pred_fallthru
          _
        // Predicated region
        $region17: #{tpu_custom_call.1} parent=11 // pred_check
          %p213 = pneg %p116
        $region18: #{tpu_custom_call.1} parent=11 // pred_check_branch
          %215 = sbr.rel (%p213) target = $region20
        $region19: #{tpu_custom_call.1} parent=11 // pred_region
          %217 = vsyncadd [#allocation9], 0
          %s218 = sshll.u32 %s3, 4
          %s219 = int_to_ptr.hbm [resolvable:$true] %s218
          %s220 = sshll.u32 [#allocation8], 4
          %s221 = int_to_ptr.vmem [resolvable:$true] %s220
          %226 = dma.hbm_to_vmem [thread:$0]  %s219, 128, %s221, [#allocation9], 64, 64, 4
        $region20: #{tpu_custom_call.1} parent=11 // pred_fallthru
          _
        // Predicated region
        $region21: #{tpu_custom_call.1} parent=11 // pred_check
          %p227 = pneg %p137
        $region22: #{tpu_custom_call.1} parent=11 // pred_check_branch
          %229 = sbr.rel (%p227) target = $region24
        $region23: #{tpu_custom_call.1} parent=11 // pred_region
          %231 = vsyncadd [#allocation9], 0
          %s232 = sshll.u32 %s4, 4
          %s233 = int_to_ptr.hbm [resolvable:$true] %s232
          %s234 = sshll.u32 [#allocation10], 4
          %s235 = int_to_ptr.vmem [resolvable:$true] %s234
          %240 = dma.hbm_to_vmem [thread:$0]  %s233, 4096, %s235, [#allocation9], 256, 256, 16
        $region24: #{tpu_custom_call.1} parent=11 // pred_fallthru
          _
        // Predicated region
        $region25: #{tpu_custom_call.1} parent=11 // pred_check
          %p241 = pneg %p158
        $region26: #{tpu_custom_call.1} parent=11 // pred_check_branch
          %243 = sbr.rel (%p241) target = $region28
        $region27: #{tpu_custom_call.1} parent=11 // pred_region
          _
        $region28: #{tpu_custom_call.1} parent=11 // pred_fallthru
          _
      $region12: #{tpu_custom_call.1} parent=5 // pred_fallthru
        _
      %p244 = scmp.lt.s32.totalorder %s22, 4
      // Predicated region
      $region29: #{tpu_custom_call.1} parent=5 // pred_check
        %p245 = pneg %p244
      $region30: #{tpu_custom_call.1} parent=5 // pred_check_branch
        %247 = sbr.rel (%p245) target = $region32
      $region31: #{tpu_custom_call.1} parent=5 // pred_region
        // Predicated region
        $region33: #{tpu_custom_call.1} parent=31 // pred_check
          %p248 = pneg %p42
        $region34: #{tpu_custom_call.1} parent=31 // pred_check_branch
          %250 = sbr.rel (%p248) target = $region36
        $region35: #{tpu_custom_call.1} parent=31 // pred_region
          %s251 = sand.u32 %s32, 1
          %s252 = scalar_lea.sflag [#allocation3], %s251
          %s253 = sand.u32 %s32, 1
          %s254 = smul.addr %s253, 8
          %s255 = scalar_lea.vmem [#allocation2], %s254
          %257 = vsyncadd %s252, 0
          %s258 = smul.addr %s22, 8
          %s259 = scalar_lea.hbm %s0, %s258
          %s261 = sshll.u32 %s259, 4
          %s262 = int_to_ptr.hbm [resolvable:$true] %s261
          %s263 = sshll.u32 %s255, 4
          %s264 = int_to_ptr.vmem [resolvable:$true] %s263
          %266 = dma.hbm_to_vmem [thread:$0]  %s262, 128, %s264, %s252
        $region36: #{tpu_custom_call.1} parent=31 // pred_fallthru
          _
        // Predicated region
        $region37: #{tpu_custom_call.1} parent=31 // pred_check
          %p267 = pneg %p68
        $region38: #{tpu_custom_call.1} parent=31 // pred_check_branch
          %269 = sbr.rel (%p267) target = $region40
        $region39: #{tpu_custom_call.1} parent=31 // pred_region
          %s270 = sand.u32 %s22, 1
          %s271 = scalar_lea.sflag [#allocation6], %s270
          %s272 = sand.u32 %s58, 1
          %s273 = smul.addr %s272, 8
          %s274 = scalar_lea.vmem [#allocation5], %s273
          %276 = vsyncadd %s271, 0
          %s277 = smul.addr %s22, 8
          %s278 = scalar_lea.hbm %s1, %s277
          %s280 = sshll.u32 %s278, 4
          %s281 = int_to_ptr.hbm [resolvable:$true] %s280
          %s282 = sshll.u32 %s274, 4
          %s283 = int_to_ptr.vmem [resolvable:$true] %s282
          %285 = dma.hbm_to_vmem [thread:$0]  %s281, 128, %s283, %s271
        $region40: #{tpu_custom_call.1} parent=31 // pred_fallthru
          _
      $region32: #{tpu_custom_call.1} parent=5 // pred_fallthru
        _
      %p286 = scmp.le.s32.totalorder 1, %s22
      %p287 = scmp.lt.s32.totalorder %s22, 5
      %p288 = pnand %p286, %p287
      %p289 = pneg %p288
      // Predicated region
      $region41: #{tpu_custom_call.1} parent=5 // pred_check
        _
      $region42: #{tpu_custom_call.1} parent=5 // pred_check_branch
        %291 = sbr.rel (%p288) target = $region44
      $region43: #{tpu_custom_call.1} parent=5 // pred_region
        %s292 = ssub.s32 %s22, 1
        %s293 = sand.u32 %s35, 1
        %s294 = scalar_lea.sflag [#allocation3], %s293
        %s295 = sand.u32 %s35, 1
        %s296 = smul.addr %s295, 8
        %s297 = scalar_lea.vmem [#allocation2], %s296
        // Predicated region
        $region45: #{tpu_custom_call.1} parent=43 // pred_check
          %p298 = pneg %p48
        $region46: #{tpu_custom_call.1} parent=43 // pred_check_branch
          %300 = sbr.rel (%p298) target = $region48
        $region47: #{tpu_custom_call.1} parent=43 // pred_region
          %302 = dma.done %s294, 128
        $region48: #{tpu_custom_call.1} parent=43 // pred_fallthru
          _
        %s303 = sand.u32 %s27, 1
        %s304 = scalar_lea.sflag [#allocation6], %s303
        %s305 = sand.u32 %s61, 1
        %s306 = smul.addr %s305, 8
        %s307 = scalar_lea.vmem [#allocation5], %s306
        // Predicated region
        $region49: #{tpu_custom_call.1} parent=43 // pred_check
          %p308 = pneg %p74
        $region50: #{tpu_custom_call.1} parent=43 // pred_check_branch
          %310 = sbr.rel (%p308) target = $region52
        $region51: #{tpu_custom_call.1} parent=43 // pred_region
          %312 = dma.done %s304, 128
        $region52: #{tpu_custom_call.1} parent=43 // pred_fallthru
          _
        // Predicated region
        $region53: #{tpu_custom_call.1} parent=43 // pred_check
          %p313 = pneg %p95
        $region54: #{tpu_custom_call.1} parent=43 // pred_check_branch
          %315 = sbr.rel (%p313) target = $region56
        $region55: #{tpu_custom_call.1} parent=43 // pred_region
          %317 = dma.done [#allocation6], 32768
        $region56: #{tpu_custom_call.1} parent=43 // pred_fallthru
          _
        // Predicated region
        $region57: #{tpu_custom_call.1} parent=43 // pred_check
          %p318 = pneg %p116
        $region58: #{tpu_custom_call.1} parent=43 // pred_check_branch
          %320 = sbr.rel (%p318) target = $region60
        $region59: #{tpu_custom_call.1} parent=43 // pred_region
          %322 = dma.done [#allocation9], 128
        $region60: #{tpu_custom_call.1} parent=43 // pred_fallthru
          _
        // Predicated region
        $region61: #{tpu_custom_call.1} parent=43 // pred_check
          %p323 = pneg %p137
        $region62: #{tpu_custom_call.1} parent=43 // pred_check_branch
          %325 = sbr.rel (%p323) target = $region64
        $region63: #{tpu_custom_call.1} parent=43 // pred_region
          %327 = dma.done [#allocation9], 4096
        $region64: #{tpu_custom_call.1} parent=43 // pred_fallthru
          _
        %s328 = sand.u32 %s35, 1
        %s329 = scalar_lea.sflag [#allocation3], %s328
        %s330 = sand.u32 %s35, 1
        %s331 = smul.addr %s330, 8
        %s332 = scalar_lea.vmem [#allocation2], %s331
        %p333 = pneg %p48
        %p334 = pneg %p45
        %s335 = sand.u32 %s27, 1
        %s336 = scalar_lea.sflag [#allocation6], %s335
        %s337 = sand.u32 %s61, 1
        %s338 = smul.addr %s337, 8
        %s339 = scalar_lea.vmem [#allocation5], %s338
        %p340 = pneg %p74
        %p341 = pneg %p71
        %p342 = pneg %p95
        %p343 = pneg %p92
        %p344 = pneg %p116
        %p345 = pneg %p113
        %p346 = pneg %p137
        %p347 = pneg %p134
        %p348 = pneg %p158
        %p349 = pneg %p155
        %p350 = pneg %p184
        %p351 = pneg %p181
        %s352 = sand.u32 %s171, 1
        %s353 = scalar_lea.sflag [#allocation4], %s352
        %s354 = sand.u32 %s171, 1
        %s355 = scalar_lea.vmem [#allocation11], %s354
        %v356 = vld [vmem:[%s297] sm:$0xff]
        %v357 = vld [vmem:[%s307] sm:$0xff]
        %vm358 = vcmask 64512
        %v360 = vsel %vm358, %v357, 0
        %362 = vmatpush.msra.mxu0 0.0
        %363 = vmatpush.msra.mxu0 0.0
        %364 = vmatpush.msra.mxu0 0.0
        %365 = vmatpush.msra.mxu0 0.0
        %366 = vmatpush.msra.mxu0 0.0
        %367 = vmatpush.msra.mxu0 0.0
        %368 = vmatpush.msra.mxu0 0.0
        %369 = vmatpush.msra.mxu0 0.0
        %370 = vmatpush.msra.mxu0 0.0
        %371 = vmatpush.msra.mxu0 0.0
        %372 = vmatpush.msra.mxu0 0.0
        %373 = vmatpush.msra.mxu0 0.0
        %374 = vmatpush.msra.mxu0 0.0
        %375 = vmatpush.msra.mxu0 0.0
        %376 = vmatpush.msra.mxu0 0.0
        %377 = vmatpush.msra.mxu0 %v356
        %378 = vmatmul.f32.gmra.mxu0 %v360
        %v379 = vpop.f32.mrf.mxu0
        %v380 = vadd.f32 0.0, %v379
        %381 = vdwg.mxu0
        %v382 = vld [vmem:[#allocation7] sm:$0xff]
        %v383 = vld [vmem:[#allocation7 + $0x8] sm:$0xff]
        %v384 = vld [vmem:[#allocation7 + $0x10] sm:$0xff]
        %v385 = vld [vmem:[#allocation7 + $0x18] sm:$0xff]
        %v386 = vld [vmem:[#allocation7 + $0x20] sm:$0xff]
        %v387 = vld [vmem:[#allocation7 + $0x28] sm:$0xff]
        %v388 = vld [vmem:[#allocation7 + $0x30] sm:$0xff]
        %v389 = vld [vmem:[#allocation7 + $0x38] sm:$0xff]
        %v390 = vld [vmem:[#allocation7 + $0x40] sm:$0xff]
        %v391 = vld [vmem:[#allocation7 + $0x48] sm:$0xff]
        %v392 = vld [vmem:[#allocation7 + $0x50] sm:$0xff]
        %v393 = vld [vmem:[#allocation7 + $0x58] sm:$0xff]
        %v394 = vld [vmem:[#allocation7 + $0x60] sm:$0xff]
        %v395 = vld [vmem:[#allocation7 + $0x68] sm:$0xff]
        %v396 = vld [vmem:[#allocation7 + $0x70] sm:$0xff]
        %v397 = vld [vmem:[#allocation7 + $0x78] sm:$0xff]
        %v398 = vld [vmem:[#allocation7 + $0x80] sm:$0xff]
        %v399 = vld [vmem:[#allocation7 + $0x88] sm:$0xff]
        %v400 = vld [vmem:[#allocation7 + $0x90] sm:$0xff]
        %v401 = vld [vmem:[#allocation7 + $0x98] sm:$0xff]
        %v402 = vld [vmem:[#allocation7 + $0xa0] sm:$0xff]
        %v403 = vld [vmem:[#allocation7 + $0xa8] sm:$0xff]
        %v404 = vld [vmem:[#allocation7 + $0xb0] sm:$0xff]
        %v405 = vld [vmem:[#allocation7 + $0xb8] sm:$0xff]
        %v406 = vld [vmem:[#allocation7 + $0xc0] sm:$0xff]
        %v407 = vld [vmem:[#allocation7 + $0xc8] sm:$0xff]
        %v408 = vld [vmem:[#allocation7 + $0xd0] sm:$0xff]
        %v409 = vld [vmem:[#allocation7 + $0xd8] sm:$0xff]
        %v410 = vld [vmem:[#allocation7 + $0xe0] sm:$0xff]
        %v411 = vld [vmem:[#allocation7 + $0xe8] sm:$0xff]
        %v412 = vld [vmem:[#allocation7 + $0xf0] sm:$0xff]
        %v413 = vld [vmem:[#allocation7 + $0xf8] sm:$0xff]
        %v414 = vld [vmem:[#allocation7 + $0x100] sm:$0xff]
        %v415 = vld [vmem:[#allocation7 + $0x108] sm:$0xff]
        %v416 = vld [vmem:[#allocation7 + $0x110] sm:$0xff]
        %v417 = vld [vmem:[#allocation7 + $0x118] sm:$0xff]
        %v418 = vld [vmem:[#allocation7 + $0x120] sm:$0xff]
        %v419 = vld [vmem:[#allocation7 + $0x128] sm:$0xff]
        %v420 = vld [vmem:[#allocation7 + $0x130] sm:$0xff]
        %v421 = vld [vmem:[#allocation7 + $0x138] sm:$0xff]
        %v422 = vld [vmem:[#allocation7 + $0x140] sm:$0xff]
        %v423 = vld [vmem:[#allocation7 + $0x148] sm:$0xff]
        %v424 = vld [vmem:[#allocation7 + $0x150] sm:$0xff]
        %v425 = vld [vmem:[#allocation7 + $0x158] sm:$0xff]
        %v426 = vld [vmem:[#allocation7 + $0x160] sm:$0xff]
        %v427 = vld [vmem:[#allocation7 + $0x168] sm:$0xff]
        %v428 = vld [vmem:[#allocation7 + $0x170] sm:$0xff]
        %v429 = vld [vmem:[#allocation7 + $0x178] sm:$0xff]
        %v430 = vld [vmem:[#allocation7 + $0x180] sm:$0xff]
        %v431 = vld [vmem:[#allocation7 + $0x188] sm:$0xff]
        %v432 = vld [vmem:[#allocation7 + $0x190] sm:$0xff]
        %v433 = vld [vmem:[#allocation7 + $0x198] sm:$0xff]
        %v434 = vld [vmem:[#allocation7 + $0x1a0] sm:$0xff]
        %v435 = vld [vmem:[#allocation7 + $0x1a8] sm:$0xff]
        %v436 = vld [vmem:[#allocation7 + $0x1b0] sm:$0xff]
        %v437 = vld [vmem:[#allocation7 + $0x1b8] sm:$0xff]
        %v438 = vld [vmem:[#allocation7 + $0x1c0] sm:$0xff]
        %v439 = vld [vmem:[#allocation7 + $0x1c8] sm:$0xff]
        %v440 = vld [vmem:[#allocation7 + $0x1d0] sm:$0xff]
        %v441 = vld [vmem:[#allocation7 + $0x1d8] sm:$0xff]
        %v442 = vld [vmem:[#allocation7 + $0x1e0] sm:$0xff]
        %v443 = vld [vmem:[#allocation7 + $0x1e8] sm:$0xff]
        %v444 = vld [vmem:[#allocation7 + $0x1f0] sm:$0xff]
        %v445 = vld [vmem:[#allocation7 + $0x1f8] sm:$0xff]
        %v446 = vld [vmem:[#allocation7 + $0x200] sm:$0xff]
        %v447 = vld [vmem:[#allocation7 + $0x208] sm:$0xff]
        %v448 = vld [vmem:[#allocation7 + $0x210] sm:$0xff]
        %v449 = vld [vmem:[#allocation7 + $0x218] sm:$0xff]
        %v450 = vld [vmem:[#allocation7 + $0x220] sm:$0xff]
        %v451 = vld [vmem:[#allocation7 + $0x228] sm:$0xff]
        %v452 = vld [vmem:[#allocation7 + $0x230] sm:$0xff]
        %v453 = vld [vmem:[#allocation7 + $0x238] sm:$0xff]
        %v454 = vld [vmem:[#allocation7 + $0x240] sm:$0xff]
        %v455 = vld [vmem:[#allocation7 + $0x248] sm:$0xff]
        %v456 = vld [vmem:[#allocation7 + $0x250] sm:$0xff]
        %v457 = vld [vmem:[#allocation7 + $0x258] sm:$0xff]
        %v458 = vld [vmem:[#allocation7 + $0x260] sm:$0xff]
        %v459 = vld [vmem:[#allocation7 + $0x268] sm:$0xff]
        %v460 = vld [vmem:[#allocation7 + $0x270] sm:$0xff]
        %v461 = vld [vmem:[#allocation7 + $0x278] sm:$0xff]
        %v462 = vld [vmem:[#allocation7 + $0x280] sm:$0xff]
        %v463 = vld [vmem:[#allocation7 + $0x288] sm:$0xff]
        %v464 = vld [vmem:[#allocation7 + $0x290] sm:$0xff]
        %v465 = vld [vmem:[#allocation7 + $0x298] sm:$0xff]
        %v466 = vld [vmem:[#allocation7 + $0x2a0] sm:$0xff]
        %v467 = vld [vmem:[#allocation7 + $0x2a8] sm:$0xff]
        %v468 = vld [vmem:[#allocation7 + $0x2b0] sm:$0xff]
        %v469 = vld [vmem:[#allocation7 + $0x2b8] sm:$0xff]
        %v470 = vld [vmem:[#allocation7 + $0x2c0] sm:$0xff]
        %v471 = vld [vmem:[#allocation7 + $0x2c8] sm:$0xff]
        %v472 = vld [vmem:[#allocation7 + $0x2d0] sm:$0xff]
        %v473 = vld [vmem:[#allocation7 + $0x2d8] sm:$0xff]
        %v474 = vld [vmem:[#allocation7 + $0x2e0] sm:$0xff]
        %v475 = vld [vmem:[#allocation7 + $0x2e8] sm:$0xff]
        %v476 = vld [vmem:[#allocation7 + $0x2f0] sm:$0xff]
        %v477 = vld [vmem:[#allocation7 + $0x2f8] sm:$0xff]
        %v478 = vld [vmem:[#allocation7 + $0x300] sm:$0xff]
        %v479 = vld [vmem:[#allocation7 + $0x308] sm:$0xff]
        %v480 = vld [vmem:[#allocation7 + $0x310] sm:$0xff]
        %v481 = vld [vmem:[#allocation7 + $0x318] sm:$0xff]
        %v482 = vld [vmem:[#allocation7 + $0x320] sm:$0xff]
        %v483 = vld [vmem:[#allocation7 + $0x328] sm:$0xff]
        %v484 = vld [vmem:[#allocation7 + $0x330] sm:$0xff]
        %v485 = vld [vmem:[#allocation7 + $0x338] sm:$0xff]
        %v486 = vld [vmem:[#allocation7 + $0x340] sm:$0xff]
        %v487 = vld [vmem:[#allocation7 + $0x348] sm:$0xff]
        %v488 = vld [vmem:[#allocation7 + $0x350] sm:$0xff]
        %v489 = vld [vmem:[#allocation7 + $0x358] sm:$0xff]
        %v490 = vld [vmem:[#allocation7 + $0x360] sm:$0xff]
        %v491 = vld [vmem:[#allocation7 + $0x368] sm:$0xff]
        %v492 = vld [vmem:[#allocation7 + $0x370] sm:$0xff]
        %v493 = vld [vmem:[#allocation7 + $0x378] sm:$0xff]
        %v494 = vld [vmem:[#allocation7 + $0x380] sm:$0xff]
        %v495 = vld [vmem:[#allocation7 + $0x388] sm:$0xff]
        %v496 = vld [vmem:[#allocation7 + $0x390] sm:$0xff]
        %v497 = vld [vmem:[#allocation7 + $0x398] sm:$0xff]
        %v498 = vld [vmem:[#allocation7 + $0x3a0] sm:$0xff]
        %v499 = vld [vmem:[#allocation7 + $0x3a8] sm:$0xff]
        %v500 = vld [vmem:[#allocation7 + $0x3b0] sm:$0xff]
        %v501 = vld [vmem:[#allocation7 + $0x3b8] sm:$0xff]
        %v502 = vld [vmem:[#allocation7 + $0x3c0] sm:$0xff]
        %v503 = vld [vmem:[#allocation7 + $0x3c8] sm:$0xff]
        %v504 = vld [vmem:[#allocation7 + $0x3d0] sm:$0xff]
        %v505 = vld [vmem:[#allocation7 + $0x3d8] sm:$0xff]
        %v506 = vld [vmem:[#allocation7 + $0x3e0] sm:$0xff]
        %v507 = vld [vmem:[#allocation7 + $0x3e8] sm:$0xff]
        %v508 = vld [vmem:[#allocation7 + $0x3f0] sm:$0xff]
        %v509 = vld [vmem:[#allocation7 + $0x3f8] sm:$0xff]
        %v510 = vld [vmem:[#allocation8] sm:$0xf]
        %v512 = vperm.slane %v510, 0
        %v513 = vperm.slane %v510, 1
        %v514 = vperm.slane %v510, 2
        %v515 = vperm.slane %v510, 3
        %520 = vmatpush.msra.mxu0 %v442
        %521 = vmatpush.msra.mxu0 %v438
        %522 = vmatpush.msra.mxu0 %v434
        %523 = vmatpush.msra.mxu0 %v430
        %524 = vmatpush.msra.mxu0 %v426
        %525 = vmatpush.msra.mxu0 %v422
        %526 = vmatpush.msra.mxu0 %v418
        %527 = vmatpush.msra.mxu0 %v414
        %528 = vmatpush.msra.mxu0 %v410
        %529 = vmatpush.msra.mxu0 %v406
        %530 = vmatpush.msra.mxu0 %v402
        %531 = vmatpush.msra.mxu0 %v398
        %532 = vmatpush.msra.mxu0 %v394
        %533 = vmatpush.msra.mxu0 %v390
        %534 = vmatpush.msra.mxu0 %v386
        %535 = vmatpush.msra.mxu0 %v382
        %536 = vmatmul.f32.gmra.mxu0 %v380
        %v537 = vpop.f32.mrf.mxu0
        %v538 = vadd.f32 %v512, %v537
        %539 = vdwg.mxu0
        %540 = vmatpush.msra.mxu0 %v506
        %541 = vmatpush.msra.mxu0 %v502
        %542 = vmatpush.msra.mxu0 %v498
        %543 = vmatpush.msra.mxu0 %v494
        %544 = vmatpush.msra.mxu0 %v490
        %545 = vmatpush.msra.mxu0 %v486
        %546 = vmatpush.msra.mxu0 %v482
        %547 = vmatpush.msra.mxu0 %v478
        %548 = vmatpush.msra.mxu0 %v474
        %549 = vmatpush.msra.mxu0 %v470
        %550 = vmatpush.msra.mxu0 %v466
        %551 = vmatpush.msra.mxu0 %v462
        %552 = vmatpush.msra.mxu0 %v458
        %553 = vmatpush.msra.mxu0 %v454
        %554 = vmatpush.msra.mxu0 %v450
        %555 = vmatpush.msra.mxu0 %v446
        %556 = vmatmul.f32.gmra.mxu0 %v356
        %v557 = vpop.f32.mrf.mxu0
        %v558 = vadd.f32 %v538, %v557
        %559 = vdwg.mxu0
        %560 = vmatpush.msra.mxu0 %v443
        %561 = vmatpush.msra.mxu0 %v439
        %562 = vmatpush.msra.mxu0 %v435
        %563 = vmatpush.msra.mxu0 %v431
        %564 = vmatpush.msra.mxu0 %v427
        %565 = vmatpush.msra.mxu0 %v423
        %566 = vmatpush.msra.mxu0 %v419
        %567 = vmatpush.msra.mxu0 %v415
        %568 = vmatpush.msra.mxu0 %v411
        %569 = vmatpush.msra.mxu0 %v407
        %570 = vmatpush.msra.mxu0 %v403
        %571 = vmatpush.msra.mxu0 %v399
        %572 = vmatpush.msra.mxu0 %v395
        %573 = vmatpush.msra.mxu0 %v391
        %574 = vmatpush.msra.mxu0 %v387
        %575 = vmatpush.msra.mxu0 %v383
        %576 = vmatmul.f32.gmra.mxu0 %v380
        %v577 = vpop.f32.mrf.mxu0
        %v578 = vadd.f32 %v513, %v577
        %579 = vdwg.mxu0
        %580 = vmatpush.msra.mxu0 %v507
        %581 = vmatpush.msra.mxu0 %v503
        %582 = vmatpush.msra.mxu0 %v499
        %583 = vmatpush.msra.mxu0 %v495
        %584 = vmatpush.msra.mxu0 %v491
        %585 = vmatpush.msra.mxu0 %v487
        %586 = vmatpush.msra.mxu0 %v483
        %587 = vmatpush.msra.mxu0 %v479
        %588 = vmatpush.msra.mxu0 %v475
        %589 = vmatpush.msra.mxu0 %v471
        %590 = vmatpush.msra.mxu0 %v467
        %591 = vmatpush.msra.mxu0 %v463
        %592 = vmatpush.msra.mxu0 %v459
        %593 = vmatpush.msra.mxu0 %v455
        %594 = vmatpush.msra.mxu0 %v451
        %595 = vmatpush.msra.mxu0 %v447
        %596 = vmatmul.f32.gmra.mxu0 %v356
        %v597 = vpop.f32.mrf.mxu0
        %v598 = vadd.f32 %v578, %v597
        %599 = vdwg.mxu0
        %600 = vmatpush.msra.mxu0 %v444
        %601 = vmatpush.msra.mxu0 %v440
        %602 = vmatpush.msra.mxu0 %v436
        %603 = vmatpush.msra.mxu0 %v432
        %604 = vmatpush.msra.mxu0 %v428
        %605 = vmatpush.msra.mxu0 %v424
        %606 = vmatpush.msra.mxu0 %v420
        %607 = vmatpush.msra.mxu0 %v416
        %608 = vmatpush.msra.mxu0 %v412
        %609 = vmatpush.msra.mxu0 %v408
        %610 = vmatpush.msra.mxu0 %v404
        %611 = vmatpush.msra.mxu0 %v400
        %612 = vmatpush.msra.mxu0 %v396
        %613 = vmatpush.msra.mxu0 %v392
        %614 = vmatpush.msra.mxu0 %v388
        %615 = vmatpush.msra.mxu0 %v384
        %616 = vmatmul.f32.gmra.mxu0 %v380
        %v617 = vpop.f32.mrf.mxu0
        %v618 = vadd.f32 %v514, %v617
        %619 = vdwg.mxu0
        %620 = vmatpush.msra.mxu0 %v508
        %621 = vmatpush.msra.mxu0 %v504
        %622 = vmatpush.msra.mxu0 %v500
        %623 = vmatpush.msra.mxu0 %v496
        %624 = vmatpush.msra.mxu0 %v492
        %625 = vmatpush.msra.mxu0 %v488
        %626 = vmatpush.msra.mxu0 %v484
        %627 = vmatpush.msra.mxu0 %v480
        %628 = vmatpush.msra.mxu0 %v476
        %629 = vmatpush.msra.mxu0 %v472
        %630 = vmatpush.msra.mxu0 %v468
        %631 = vmatpush.msra.mxu0 %v464
        %632 = vmatpush.msra.mxu0 %v460
        %633 = vmatpush.msra.mxu0 %v456
        %634 = vmatpush.msra.mxu0 %v452
        %635 = vmatpush.msra.mxu0 %v448
        %636 = vmatmul.f32.gmra.mxu0 %v356
        %v637 = vpop.f32.mrf.mxu0
        %v638 = vadd.f32 %v618, %v637
        %639 = vdwg.mxu0
        %640 = vmatpush.msra.mxu0 %v445
        %641 = vmatpush.msra.mxu0 %v441
        %642 = vmatpush.msra.mxu0 %v437
        %643 = vmatpush.msra.mxu0 %v433
        %644 = vmatpush.msra.mxu0 %v429
        %645 = vmatpush.msra.mxu0 %v425
        %646 = vmatpush.msra.mxu0 %v421
        %647 = vmatpush.msra.mxu0 %v417
        %648 = vmatpush.msra.mxu0 %v413
        %649 = vmatpush.msra.mxu0 %v409
        %650 = vmatpush.msra.mxu0 %v405
        %651 = vmatpush.msra.mxu0 %v401
        %652 = vmatpush.msra.mxu0 %v397
        %653 = vmatpush.msra.mxu0 %v393
        %654 = vmatpush.msra.mxu0 %v389
        %655 = vmatpush.msra.mxu0 %v385
        %656 = vmatmul.f32.gmra.mxu0 %v380
        %v657 = vpop.f32.mrf.mxu0
        %v658 = vadd.f32 %v515, %v657
        %659 = vdwg.mxu0
        %660 = vmatpush.msra.mxu0 %v509
        %661 = vmatpush.msra.mxu0 %v505
        %662 = vmatpush.msra.mxu0 %v501
        %663 = vmatpush.msra.mxu0 %v497
        %664 = vmatpush.msra.mxu0 %v493
        %665 = vmatpush.msra.mxu0 %v489
        %666 = vmatpush.msra.mxu0 %v485
        %667 = vmatpush.msra.mxu0 %v481
        %668 = vmatpush.msra.mxu0 %v477
        %669 = vmatpush.msra.mxu0 %v473
        %670 = vmatpush.msra.mxu0 %v469
        %671 = vmatpush.msra.mxu0 %v465
        %672 = vmatpush.msra.mxu0 %v461
        %673 = vmatpush.msra.mxu0 %v457
        %674 = vmatpush.msra.mxu0 %v453
        %675 = vmatpush.msra.mxu0 %v449
        %676 = vmatmul.f32.gmra.mxu0 %v356
        %v677 = vpop.f32.mrf.mxu0
        %v678 = vadd.f32 %v658, %v677
        %679 = vdwg.mxu0
        %v680 = vxor.u32 %v558, 2147483648
        %v681 = vmul.f32 %v680, 1.442695
        %v682 = vpow.pop %v681
        %v683 = vadd.f32 %v682, 1.0
        %v684 = vrcp.pop %v683
        %v685 = vmul.f32 %v683, %v684
        %v686 = vsub.f32 1.0, %v685
        %v687 = vmul.f32 %v684, %v686
        %v688 = vadd.f32 %v684, %v687
        %vm689 = vweird.f32 %v683
        %vm690 = vweird.f32 %v684
        %vm691 = vmor %vm689, %vm690
        %v692 = vsel %vm691, %v684, %v688
        %v693 = vand.u32 2147483647, %v683
        %vm694 = vcmp.eq.f32.partialorder %v693, 8.507059e+37
        %v695 = vand.u32 %v683, 2147483648
        %v696 = vor.u32 1.1754944e-38, %v695
        %v697 = vsel %vm694, %v696, %v692
        %v698 = vmul.f32 1.0, %v697
        %v699 = vxor.u32 %v598, 2147483648
        %v700 = vmul.f32 %v699, 1.442695
        %v701 = vpow.pop %v700
        %v702 = vadd.f32 %v701, 1.0
        %v703 = vrcp.pop %v702
        %v704 = vmul.f32 %v702, %v703
        %v705 = vsub.f32 1.0, %v704
        %v706 = vmul.f32 %v703, %v705
        %v707 = vadd.f32 %v703, %v706
        %vm708 = vweird.f32 %v702
        %vm709 = vweird.f32 %v703
        %vm710 = vmor %vm708, %vm709
        %v711 = vsel %vm710, %v703, %v707
        %v712 = vand.u32 2147483647, %v702
        %vm713 = vcmp.eq.f32.partialorder %v712, 8.507059e+37
        %v714 = vand.u32 %v702, 2147483648
        %v715 = vor.u32 1.1754944e-38, %v714
        %v716 = vsel %vm713, %v715, %v711
        %v717 = vmul.f32 1.0, %v716
        %v718 = vmul.f32 %v698, %v678
        %v719 = vadd.f32 %v638, %v718
        %v720 = vtanh.pop %v719
        %v721 = vsub.f32 1.0, %v717
        %v722 = vmul.f32 %v721, %v720
        %v723 = vmul.f32 %v717, %v356
        %v724 = vadd.f32 %v722, %v723
        %725 = vmatpush.msra.mxu0 0.0
        %726 = vmatpush.msra.mxu0 0.0
        %727 = vmatpush.msra.mxu0 0.0
        %728 = vmatpush.msra.mxu0 0.0
        %729 = vmatpush.msra.mxu0 0.0
        %730 = vmatpush.msra.mxu0 0.0
        %731 = vmatpush.msra.mxu0 0.0
        %732 = vmatpush.msra.mxu0 0.0
        %733 = vmatpush.msra.mxu0 0.0
        %734 = vmatpush.msra.mxu0 0.0
        %735 = vmatpush.msra.mxu0 0.0
        %736 = vmatpush.msra.mxu0 0.0
        %737 = vmatpush.msra.mxu0 0.0
        %738 = vmatpush.msra.mxu0 0.0
        %739 = vmatpush.msra.mxu0 0.0
        %740 = vmatpush.msra.mxu0 %v724
        %741 = vmatmul.f32.gmra.mxu0 %v360
        %v742 = vpop.f32.mrf.mxu0
        %v743 = vadd.f32 0.0, %v742
        %744 = vdwg.mxu0
        %s745 = scalar_lea.vmem [#allocation7], 1024
        %v746 = vld [vmem:[%s745] sm:$0xff]
        %v747 = vld [vmem:[%s745 + $0x8] sm:$0xff]
        %v748 = vld [vmem:[%s745 + $0x10] sm:$0xff]
        %v749 = vld [vmem:[%s745 + $0x18] sm:$0xff]
        %v750 = vld [vmem:[%s745 + $0x20] sm:$0xff]
        %v751 = vld [vmem:[%s745 + $0x28] sm:$0xff]
        %v752 = vld [vmem:[%s745 + $0x30] sm:$0xff]
        %v753 = vld [vmem:[%s745 + $0x38] sm:$0xff]
        %v754 = vld [vmem:[%s745 + $0x40] sm:$0xff]
        %v755 = vld [vmem:[%s745 + $0x48] sm:$0xff]
        %v756 = vld [vmem:[%s745 + $0x50] sm:$0xff]
        %v757 = vld [vmem:[%s745 + $0x58] sm:$0xff]
        %v758 = vld [vmem:[%s745 + $0x60] sm:$0xff]
        %v759 = vld [vmem:[%s745 + $0x68] sm:$0xff]
        %v760 = vld [vmem:[%s745 + $0x70] sm:$0xff]
        %v761 = vld [vmem:[%s745 + $0x78] sm:$0xff]
        %v762 = vld [vmem:[%s745 + $0x80] sm:$0xff]
        %v763 = vld [vmem:[%s745 + $0x88] sm:$0xff]
        %v764 = vld [vmem:[%s745 + $0x90] sm:$0xff]
        %v765 = vld [vmem:[%s745 + $0x98] sm:$0xff]
        %v766 = vld [vmem:[%s745 + $0xa0] sm:$0xff]
        %v767 = vld [vmem:[%s745 + $0xa8] sm:$0xff]
        %v768 = vld [vmem:[%s745 + $0xb0] sm:$0xff]
        %v769 = vld [vmem:[%s745 + $0xb8] sm:$0xff]
        %v770 = vld [vmem:[%s745 + $0xc0] sm:$0xff]
        %v771 = vld [vmem:[%s745 + $0xc8] sm:$0xff]
        %v772 = vld [vmem:[%s745 + $0xd0] sm:$0xff]
        %v773 = vld [vmem:[%s745 + $0xd8] sm:$0xff]
        %v774 = vld [vmem:[%s745 + $0xe0] sm:$0xff]
        %v775 = vld [vmem:[%s745 + $0xe8] sm:$0xff]
        %v776 = vld [vmem:[%s745 + $0xf0] sm:$0xff]
        %v777 = vld [vmem:[%s745 + $0xf8] sm:$0xff]
        %v778 = vld [vmem:[%s745 + $0x100] sm:$0xff]
        %v779 = vld [vmem:[%s745 + $0x108] sm:$0xff]
        %v780 = vld [vmem:[%s745 + $0x110] sm:$0xff]
        %v781 = vld [vmem:[%s745 + $0x118] sm:$0xff]
        %v782 = vld [vmem:[%s745 + $0x120] sm:$0xff]
        %v783 = vld [vmem:[%s745 + $0x128] sm:$0xff]
        %v784 = vld [vmem:[%s745 + $0x130] sm:$0xff]
        %v785 = vld [vmem:[%s745 + $0x138] sm:$0xff]
        %v786 = vld [vmem:[%s745 + $0x140] sm:$0xff]
        %v787 = vld [vmem:[%s745 + $0x148] sm:$0xff]
        %v788 = vld [vmem:[%s745 + $0x150] sm:$0xff]
        %v789 = vld [vmem:[%s745 + $0x158] sm:$0xff]
        %v790 = vld [vmem:[%s745 + $0x160] sm:$0xff]
        %v791 = vld [vmem:[%s745 + $0x168] sm:$0xff]
        %v792 = vld [vmem:[%s745 + $0x170] sm:$0xff]
        %v793 = vld [vmem:[%s745 + $0x178] sm:$0xff]
        %v794 = vld [vmem:[%s745 + $0x180] sm:$0xff]
        %v795 = vld [vmem:[%s745 + $0x188] sm:$0xff]
        %v796 = vld [vmem:[%s745 + $0x190] sm:$0xff]
        %v797 = vld [vmem:[%s745 + $0x198] sm:$0xff]
        %v798 = vld [vmem:[%s745 + $0x1a0] sm:$0xff]
        %v799 = vld [vmem:[%s745 + $0x1a8] sm:$0xff]
        %v800 = vld [vmem:[%s745 + $0x1b0] sm:$0xff]
        %v801 = vld [vmem:[%s745 + $0x1b8] sm:$0xff]
        %v802 = vld [vmem:[%s745 + $0x1c0] sm:$0xff]
        %v803 = vld [vmem:[%s745 + $0x1c8] sm:$0xff]
        %v804 = vld [vmem:[%s745 + $0x1d0] sm:$0xff]
        %v805 = vld [vmem:[%s745 + $0x1d8] sm:$0xff]
        %v806 = vld [vmem:[%s745 + $0x1e0] sm:$0xff]
        %v807 = vld [vmem:[%s745 + $0x1e8] sm:$0xff]
        %v808 = vld [vmem:[%s745 + $0x1f0] sm:$0xff]
        %v809 = vld [vmem:[%s745 + $0x1f8] sm:$0xff]
        %v810 = vld [vmem:[%s745 + $0x200] sm:$0xff]
        %v811 = vld [vmem:[%s745 + $0x208] sm:$0xff]
        %v812 = vld [vmem:[%s745 + $0x210] sm:$0xff]
        %v813 = vld [vmem:[%s745 + $0x218] sm:$0xff]
        %v814 = vld [vmem:[%s745 + $0x220] sm:$0xff]
        %v815 = vld [vmem:[%s745 + $0x228] sm:$0xff]
        %v816 = vld [vmem:[%s745 + $0x230] sm:$0xff]
        %v817 = vld [vmem:[%s745 + $0x238] sm:$0xff]
        %v818 = vld [vmem:[%s745 + $0x240] sm:$0xff]
        %v819 = vld [vmem:[%s745 + $0x248] sm:$0xff]
        %v820 = vld [vmem:[%s745 + $0x250] sm:$0xff]
        %v821 = vld [vmem:[%s745 + $0x258] sm:$0xff]
        %v822 = vld [vmem:[%s745 + $0x260] sm:$0xff]
        %v823 = vld [vmem:[%s745 + $0x268] sm:$0xff]
        %v824 = vld [vmem:[%s745 + $0x270] sm:$0xff]
        %v825 = vld [vmem:[%s745 + $0x278] sm:$0xff]
        %v826 = vld [vmem:[%s745 + $0x280] sm:$0xff]
        %v827 = vld [vmem:[%s745 + $0x288] sm:$0xff]
        %v828 = vld [vmem:[%s745 + $0x290] sm:$0xff]
        %v829 = vld [vmem:[%s745 + $0x298] sm:$0xff]
        %v830 = vld [vmem:[%s745 + $0x2a0] sm:$0xff]
        %v831 = vld [vmem:[%s745 + $0x2a8] sm:$0xff]
        %v832 = vld [vmem:[%s745 + $0x2b0] sm:$0xff]
        %v833 = vld [vmem:[%s745 + $0x2b8] sm:$0xff]
        %v834 = vld [vmem:[%s745 + $0x2c0] sm:$0xff]
        %v835 = vld [vmem:[%s745 + $0x2c8] sm:$0xff]
        %v836 = vld [vmem:[%s745 + $0x2d0] sm:$0xff]
        %v837 = vld [vmem:[%s745 + $0x2d8] sm:$0xff]
        %v838 = vld [vmem:[%s745 + $0x2e0] sm:$0xff]
        %v839 = vld [vmem:[%s745 + $0x2e8] sm:$0xff]
        %v840 = vld [vmem:[%s745 + $0x2f0] sm:$0xff]
        %v841 = vld [vmem:[%s745 + $0x2f8] sm:$0xff]
        %v842 = vld [vmem:[%s745 + $0x300] sm:$0xff]
        %v843 = vld [vmem:[%s745 + $0x308] sm:$0xff]
        %v844 = vld [vmem:[%s745 + $0x310] sm:$0xff]
        %v845 = vld [vmem:[%s745 + $0x318] sm:$0xff]
        %v846 = vld [vmem:[%s745 + $0x320] sm:$0xff]
        %v847 = vld [vmem:[%s745 + $0x328] sm:$0xff]
        %v848 = vld [vmem:[%s745 + $0x330] sm:$0xff]
        %v849 = vld [vmem:[%s745 + $0x338] sm:$0xff]
        %v850 = vld [vmem:[%s745 + $0x340] sm:$0xff]
        %v851 = vld [vmem:[%s745 + $0x348] sm:$0xff]
        %v852 = vld [vmem:[%s745 + $0x350] sm:$0xff]
        %v853 = vld [vmem:[%s745 + $0x358] sm:$0xff]
        %v854 = vld [vmem:[%s745 + $0x360] sm:$0xff]
        %v855 = vld [vmem:[%s745 + $0x368] sm:$0xff]
        %v856 = vld [vmem:[%s745 + $0x370] sm:$0xff]
        %v857 = vld [vmem:[%s745 + $0x378] sm:$0xff]
        %v858 = vld [vmem:[%s745 + $0x380] sm:$0xff]
        %v859 = vld [vmem:[%s745 + $0x388] sm:$0xff]
        %v860 = vld [vmem:[%s745 + $0x390] sm:$0xff]
        %v861 = vld [vmem:[%s745 + $0x398] sm:$0xff]
        %v862 = vld [vmem:[%s745 + $0x3a0] sm:$0xff]
        %v863 = vld [vmem:[%s745 + $0x3a8] sm:$0xff]
        %v864 = vld [vmem:[%s745 + $0x3b0] sm:$0xff]
        %v865 = vld [vmem:[%s745 + $0x3b8] sm:$0xff]
        %v866 = vld [vmem:[%s745 + $0x3c0] sm:$0xff]
        %v867 = vld [vmem:[%s745 + $0x3c8] sm:$0xff]
        %v868 = vld [vmem:[%s745 + $0x3d0] sm:$0xff]
        %v869 = vld [vmem:[%s745 + $0x3d8] sm:$0xff]
        %v870 = vld [vmem:[%s745 + $0x3e0] sm:$0xff]
        %v871 = vld [vmem:[%s745 + $0x3e8] sm:$0xff]
        %v872 = vld [vmem:[%s745 + $0x3f0] sm:$0xff]
        %v873 = vld [vmem:[%s745 + $0x3f8] sm:$0xff]
        %s874 = scalar_lea.vmem [#allocation8], 4
        %v875 = vld [vmem:[%s874] sm:$0xf]
        %v877 = vperm.slane %v875, 0
        %v878 = vperm.slane %v875, 1
        %v879 = vperm.slane %v875, 2
        %v880 = vperm.slane %v875, 3
        %885 = vmatpush.msra.mxu0 %v806
        %886 = vmatpush.msra.mxu0 %v802
        %887 = vmatpush.msra.mxu0 %v798
        %888 = vmatpush.msra.mxu0 %v794
        %889 = vmatpush.msra.mxu0 %v790
        %890 = vmatpush.msra.mxu0 %v786
        %891 = vmatpush.msra.mxu0 %v782
        %892 = vmatpush.msra.mxu0 %v778
        %893 = vmatpush.msra.mxu0 %v774
        %894 = vmatpush.msra.mxu0 %v770
        %895 = vmatpush.msra.mxu0 %v766
        %896 = vmatpush.msra.mxu0 %v762
        %897 = vmatpush.msra.mxu0 %v758
        %898 = vmatpush.msra.mxu0 %v754
        %899 = vmatpush.msra.mxu0 %v750
        %900 = vmatpush.msra.mxu0 %v746
        %901 = vmatmul.f32.gmra.mxu0 %v743
        %v902 = vpop.f32.mrf.mxu0
        %v903 = vadd.f32 %v877, %v902
        %904 = vdwg.mxu0
        %905 = vmatpush.msra.mxu0 %v870
        %906 = vmatpush.msra.mxu0 %v866
        %907 = vmatpush.msra.mxu0 %v862
        %908 = vmatpush.msra.mxu0 %v858
        %909 = vmatpush.msra.mxu0 %v854
        %910 = vmatpush.msra.mxu0 %v850
        %911 = vmatpush.msra.mxu0 %v846
        %912 = vmatpush.msra.mxu0 %v842
        %913 = vmatpush.msra.mxu0 %v838
        %914 = vmatpush.msra.mxu0 %v834
        %915 = vmatpush.msra.mxu0 %v830
        %916 = vmatpush.msra.mxu0 %v826
        %917 = vmatpush.msra.mxu0 %v822
        %918 = vmatpush.msra.mxu0 %v818
        %919 = vmatpush.msra.mxu0 %v814
        %920 = vmatpush.msra.mxu0 %v810
        %921 = vmatmul.f32.gmra.mxu0 %v724
        %v922 = vpop.f32.mrf.mxu0
        %v923 = vadd.f32 %v903, %v922
        %924 = vdwg.mxu0
        %925 = vmatpush.msra.mxu0 %v807
        %926 = vmatpush.msra.mxu0 %v803
        %927 = vmatpush.msra.mxu0 %v799
        %928 = vmatpush.msra.mxu0 %v795
        %929 = vmatpush.msra.mxu0 %v791
        %930 = vmatpush.msra.mxu0 %v787
        %931 = vmatpush.msra.mxu0 %v783
        %932 = vmatpush.msra.mxu0 %v779
        %933 = vmatpush.msra.mxu0 %v775
        %934 = vmatpush.msra.mxu0 %v771
        %935 = vmatpush.msra.mxu0 %v767
        %936 = vmatpush.msra.mxu0 %v763
        %937 = vmatpush.msra.mxu0 %v759
        %938 = vmatpush.msra.mxu0 %v755
        %939 = vmatpush.msra.mxu0 %v751
        %940 = vmatpush.msra.mxu0 %v747
        %941 = vmatmul.f32.gmra.mxu0 %v743
        %v942 = vpop.f32.mrf.mxu0
        %v943 = vadd.f32 %v878, %v942
        %944 = vdwg.mxu0
        %945 = vmatpush.msra.mxu0 %v871
        %946 = vmatpush.msra.mxu0 %v867
        %947 = vmatpush.msra.mxu0 %v863
        %948 = vmatpush.msra.mxu0 %v859
        %949 = vmatpush.msra.mxu0 %v855
        %950 = vmatpush.msra.mxu0 %v851
        %951 = vmatpush.msra.mxu0 %v847
        %952 = vmatpush.msra.mxu0 %v843
        %953 = vmatpush.msra.mxu0 %v839
        %954 = vmatpush.msra.mxu0 %v835
        %955 = vmatpush.msra.mxu0 %v831
        %956 = vmatpush.msra.mxu0 %v827
        %957 = vmatpush.msra.mxu0 %v823
        %958 = vmatpush.msra.mxu0 %v819
        %959 = vmatpush.msra.mxu0 %v815
        %960 = vmatpush.msra.mxu0 %v811
        %961 = vmatmul.f32.gmra.mxu0 %v724
        %v962 = vpop.f32.mrf.mxu0
        %v963 = vadd.f32 %v943, %v962
        %964 = vdwg.mxu0
        %965 = vmatpush.msra.mxu0 %v808
        %966 = vmatpush.msra.mxu0 %v804
        %967 = vmatpush.msra.mxu0 %v800
        %968 = vmatpush.msra.mxu0 %v796
        %969 = vmatpush.msra.mxu0 %v792
        %970 = vmatpush.msra.mxu0 %v788
        %971 = vmatpush.msra.mxu0 %v784
        %972 = vmatpush.msra.mxu0 %v780
        %973 = vmatpush.msra.mxu0 %v776
        %974 = vmatpush.msra.mxu0 %v772
        %975 = vmatpush.msra.mxu0 %v768
        %976 = vmatpush.msra.mxu0 %v764
        %977 = vmatpush.msra.mxu0 %v760
        %978 = vmatpush.msra.mxu0 %v756
        %979 = vmatpush.msra.mxu0 %v752
        %980 = vmatpush.msra.mxu0 %v748
        %981 = vmatmul.f32.gmra.mxu0 %v743
        %v982 = vpop.f32.mrf.mxu0
        %v983 = vadd.f32 %v879, %v982
        %984 = vdwg.mxu0
        %985 = vmatpush.msra.mxu0 %v872
        %986 = vmatpush.msra.mxu0 %v868
        %987 = vmatpush.msra.mxu0 %v864
        %988 = vmatpush.msra.mxu0 %v860
        %989 = vmatpush.msra.mxu0 %v856
        %990 = vmatpush.msra.mxu0 %v852
        %991 = vmatpush.msra.mxu0 %v848
        %992 = vmatpush.msra.mxu0 %v844
        %993 = vmatpush.msra.mxu0 %v840
        %994 = vmatpush.msra.mxu0 %v836
        %995 = vmatpush.msra.mxu0 %v832
        %996 = vmatpush.msra.mxu0 %v828
        %997 = vmatpush.msra.mxu0 %v824
        %998 = vmatpush.msra.mxu0 %v820
        %999 = vmatpush.msra.mxu0 %v816
        %1000 = vmatpush.msra.mxu0 %v812
        %1001 = vmatmul.f32.gmra.mxu0 %v724
        %v1002 = vpop.f32.mrf.mxu0
        %v1003 = vadd.f32 %v983, %v1002
        %1004 = vdwg.mxu0
        %1005 = vmatpush.msra.mxu0 %v809
        %1006 = vmatpush.msra.mxu0 %v805
        %1007 = vmatpush.msra.mxu0 %v801
        %1008 = vmatpush.msra.mxu0 %v797
        %1009 = vmatpush.msra.mxu0 %v793
        %1010 = vmatpush.msra.mxu0 %v789
        %1011 = vmatpush.msra.mxu0 %v785
        %1012 = vmatpush.msra.mxu0 %v781
        %1013 = vmatpush.msra.mxu0 %v777
        %1014 = vmatpush.msra.mxu0 %v773
        %1015 = vmatpush.msra.mxu0 %v769
        %1016 = vmatpush.msra.mxu0 %v765
        %1017 = vmatpush.msra.mxu0 %v761
        %1018 = vmatpush.msra.mxu0 %v757
        %1019 = vmatpush.msra.mxu0 %v753
        %1020 = vmatpush.msra.mxu0 %v749
        %1021 = vmatmul.f32.gmra.mxu0 %v743
        %v1022 = vpop.f32.mrf.mxu0
        %v1023 = vadd.f32 %v880, %v1022
        %1024 = vdwg.mxu0
        %1025 = vmatpush.msra.mxu0 %v873
        %1026 = vmatpush.msra.mxu0 %v869
        %1027 = vmatpush.msra.mxu0 %v865
        %1028 = vmatpush.msra.mxu0 %v861
        %1029 = vmatpush.msra.mxu0 %v857
        %1030 = vmatpush.msra.mxu0 %v853
        %1031 = vmatpush.msra.mxu0 %v849
        %1032 = vmatpush.msra.mxu0 %v845
        %1033 = vmatpush.msra.mxu0 %v841
        %1034 = vmatpush.msra.mxu0 %v837
        %1035 = vmatpush.msra.mxu0 %v833
        %1036 = vmatpush.msra.mxu0 %v829
        %1037 = vmatpush.msra.mxu0 %v825
        %1038 = vmatpush.msra.mxu0 %v821
        %1039 = vmatpush.msra.mxu0 %v817
        %1040 = vmatpush.msra.mxu0 %v813
        %1041 = vmatmul.f32.gmra.mxu0 %v724
        %v1042 = vpop.f32.mrf.mxu0
        %v1043 = vadd.f32 %v1023, %v1042
        %1044 = vdwg.mxu0
        %v1045 = vxor.u32 %v923, 2147483648
        %v1046 = vmul.f32 %v1045, 1.442695
        %v1047 = vpow.pop %v1046
        %v1048 = vadd.f32 %v1047, 1.0
        %v1049 = vrcp.pop %v1048
        %v1050 = vmul.f32 %v1048, %v1049
        %v1051 = vsub.f32 1.0, %v1050
        %v1052 = vmul.f32 %v1049, %v1051
        %v1053 = vadd.f32 %v1049, %v1052
        %vm1054 = vweird.f32 %v1048
        %vm1055 = vweird.f32 %v1049
        %vm1056 = vmor %vm1054, %vm1055
        %v1057 = vsel %vm1056, %v1049, %v1053
        %v1058 = vand.u32 2147483647, %v1048
        %vm1059 = vcmp.eq.f32.partialorder %v1058, 8.507059e+37
        %v1060 = vand.u32 %v1048, 2147483648
        %v1061 = vor.u32 1.1754944e-38, %v1060
        %v1062 = vsel %vm1059, %v1061, %v1057
        %v1063 = vmul.f32 1.0, %v1062
        %v1064 = vxor.u32 %v963, 2147483648
        %v1065 = vmul.f32 %v1064, 1.442695
        %v1066 = vpow.pop %v1065
        %v1067 = vadd.f32 %v1066, 1.0
        %v1068 = vrcp.pop %v1067
        %v1069 = vmul.f32 %v1067, %v1068
        %v1070 = vsub.f32 1.0, %v1069
        %v1071 = vmul.f32 %v1068, %v1070
        %v1072 = vadd.f32 %v1068, %v1071
        %vm1073 = vweird.f32 %v1067
        %vm1074 = vweird.f32 %v1068
        %vm1075 = vmor %vm1073, %vm1074
        %v1076 = vsel %vm1075, %v1068, %v1072
        %v1077 = vand.u32 2147483647, %v1067
        %vm1078 = vcmp.eq.f32.partialorder %v1077, 8.507059e+37
        %v1079 = vand.u32 %v1067, 2147483648
        %v1080 = vor.u32 1.1754944e-38, %v1079
        %v1081 = vsel %vm1078, %v1080, %v1076
        %v1082 = vmul.f32 1.0, %v1081
        %v1083 = vmul.f32 %v1063, %v1043
        %v1084 = vadd.f32 %v1003, %v1083
        %v1085 = vtanh.pop %v1084
        %v1086 = vsub.f32 1.0, %v1082
        %v1087 = vmul.f32 %v1086, %v1085
        %v1088 = vmul.f32 %v1082, %v724
        %v1089 = vadd.f32 %v1087, %v1088
        %v1090 = vmax.f32 %v1089, 0.0
        %v1091 = vld [vmem:[#allocation10] sm:$0xff]
        %v1092 = vld [vmem:[#allocation10 + $0x8] sm:$0xff]
        %v1093 = vld [vmem:[#allocation10 + $0x10] sm:$0xff]
        %v1094 = vld [vmem:[#allocation10 + $0x18] sm:$0xff]
        %v1095 = vld [vmem:[#allocation10 + $0x20] sm:$0xff]
        %v1096 = vld [vmem:[#allocation10 + $0x28] sm:$0xff]
        %v1097 = vld [vmem:[#allocation10 + $0x30] sm:$0xff]
        %v1098 = vld [vmem:[#allocation10 + $0x38] sm:$0xff]
        %v1099 = vld [vmem:[#allocation10 + $0x40] sm:$0xff]
        %v1100 = vld [vmem:[#allocation10 + $0x48] sm:$0xff]
        %v1101 = vld [vmem:[#allocation10 + $0x50] sm:$0xff]
        %v1102 = vld [vmem:[#allocation10 + $0x58] sm:$0xff]
        %v1103 = vld [vmem:[#allocation10 + $0x60] sm:$0xff]
        %v1104 = vld [vmem:[#allocation10 + $0x68] sm:$0xff]
        %v1105 = vld [vmem:[#allocation10 + $0x70] sm:$0xff]
        %v1106 = vld [vmem:[#allocation10 + $0x78] sm:$0xff]
        %v1107 = vld [vmem:[#allocation10 + $0x80] sm:$0xff]
        %v1108 = vld [vmem:[#allocation10 + $0x88] sm:$0xff]
        %v1109 = vld [vmem:[#allocation10 + $0x90] sm:$0xff]
        %v1110 = vld [vmem:[#allocation10 + $0x98] sm:$0xff]
        %v1111 = vld [vmem:[#allocation10 + $0xa0] sm:$0xff]
        %v1112 = vld [vmem:[#allocation10 + $0xa8] sm:$0xff]
        %v1113 = vld [vmem:[#allocation10 + $0xb0] sm:$0xff]
        %v1114 = vld [vmem:[#allocation10 + $0xb8] sm:$0xff]
        %v1115 = vld [vmem:[#allocation10 + $0xc0] sm:$0xff]
        %v1116 = vld [vmem:[#allocation10 + $0xc8] sm:$0xff]
        %v1117 = vld [vmem:[#allocation10 + $0xd0] sm:$0xff]
        %v1118 = vld [vmem:[#allocation10 + $0xd8] sm:$0xff]
        %v1119 = vld [vmem:[#allocation10 + $0xe0] sm:$0xff]
        %v1120 = vld [vmem:[#allocation10 + $0xe8] sm:$0xff]
        %v1121 = vld [vmem:[#allocation10 + $0xf0] sm:$0xff]
        %v1122 = vld [vmem:[#allocation10 + $0xf8] sm:$0xff]
        %v1123 = vld [vmem:[%s5] sm:$0x3]
        %v1125 = vperm.slane %v1123, 0
        %v1126 = vperm.slane %v1123, 1
        %1129 = vmatpush.msra.mxu0 %v1121
        %1130 = vmatpush.msra.mxu0 %v1119
        %1131 = vmatpush.msra.mxu0 %v1117
        %1132 = vmatpush.msra.mxu0 %v1115
        %1133 = vmatpush.msra.mxu0 %v1113
        %1134 = vmatpush.msra.mxu0 %v1111
        %1135 = vmatpush.msra.mxu0 %v1109
        %1136 = vmatpush.msra.mxu0 %v1107
        %1137 = vmatpush.msra.mxu0 %v1105
        %1138 = vmatpush.msra.mxu0 %v1103
        %1139 = vmatpush.msra.mxu0 %v1101
        %1140 = vmatpush.msra.mxu0 %v1099
        %1141 = vmatpush.msra.mxu0 %v1097
        %1142 = vmatpush.msra.mxu0 %v1095
        %1143 = vmatpush.msra.mxu0 %v1093
        %1144 = vmatpush.msra.mxu0 %v1091
        %1145 = vmatmul.f32.gmra.mxu0 %v1090
        %v1146 = vpop.f32.mrf.mxu0
        %v1147 = vadd.f32 %v1125, %v1146
        %1148 = vdwg.mxu0
        %1149 = vmatpush.msra.mxu0 %v1122
        %1150 = vmatpush.msra.mxu0 %v1120
        %1151 = vmatpush.msra.mxu0 %v1118
        %1152 = vmatpush.msra.mxu0 %v1116
        %1153 = vmatpush.msra.mxu0 %v1114
        %1154 = vmatpush.msra.mxu0 %v1112
        %1155 = vmatpush.msra.mxu0 %v1110
        %1156 = vmatpush.msra.mxu0 %v1108
        %1157 = vmatpush.msra.mxu0 %v1106
        %1158 = vmatpush.msra.mxu0 %v1104
        %1159 = vmatpush.msra.mxu0 %v1102
        %1160 = vmatpush.msra.mxu0 %v1100
        %1161 = vmatpush.msra.mxu0 %v1098
        %1162 = vmatpush.msra.mxu0 %v1096
        %1163 = vmatpush.msra.mxu0 %v1094
        %1164 = vmatpush.msra.mxu0 %v1092
        %1165 = vmatmul.f32.gmra.mxu0 %v1090
        %v1166 = vpop.f32.mrf.mxu0
        %v1167 = vadd.f32 %v1126, %v1166
        %1168 = vdwg.mxu0
        %vm1169 = vcmask 7168
        %v1170 = vsel %vm1169, %v1167, -inf
        %v1171 = vrot.slane %v1170, 4
        %v1172 = vmax.f32 %v1170, %v1171
        %v1173 = vrot.slane %v1172, 2
        %v1174 = vmax.f32 %v1172, %v1173
        %v1175 = vrot.slane %v1174, 1
        %v1176 = vmax.f32 %v1174, %v1175
        %v1177 = vsub.f32 %v1167, %v1176
        %v1178 = vmul.f32 %v1177, 1.442695
        %v1179 = vpow.pop %v1178
        %v1180 = vsel %vm1169, %v1179, 0.0
        %v1181 = vrot.slane %v1180, 4
        %v1182 = vadd.f32 %v1180, %v1181
        %v1183 = vrot.slane %v1182, 2
        %v1184 = vadd.f32 %v1182, %v1183
        %v1185 = vrot.slane %v1184, 1
        %v1186 = vadd.f32 %v1184, %v1185
        %v1187 = vrcp.pop %v1186
        %v1188 = vmul.f32 %v1186, %v1187
        %v1189 = vsub.f32 1.0, %v1188
        %v1190 = vmul.f32 %v1187, %v1189
        %v1191 = vadd.f32 %v1187, %v1190
        %vm1192 = vweird.f32 %v1186
        %vm1193 = vweird.f32 %v1187
        %vm1194 = vmor %vm1192, %vm1193
        %v1195 = vsel %vm1194, %v1187, %v1191
        %v1196 = vand.u32 2147483647, %v1186
        %vm1197 = vcmp.eq.f32.partialorder %v1196, 8.507059e+37
        %v1198 = vand.u32 %v1186, 2147483648
        %v1199 = vor.u32 1.1754944e-38, %v1198
        %v1200 = vsel %vm1197, %v1199, %v1195
        %v1201 = vmul.f32 %v1179, %v1200
        %1203 = vset.pattern.permute.xlu0 0
        %1204 = vperm.xlu0 %1203, %v1201
        %v1205 = vpop.permute.xlu0 %1204
        %v1207 = vmul.f32 %v1205, %v1147
        %v1208 = vrot.slane %v1207, 4
        %v1209 = vadd.f32 %v1207, %v1208
        %v1210 = vrot.slane %v1209, 2
        %v1211 = vadd.f32 %v1209, %v1210
        %v1212 = vrot.slane %v1211, 1
        %v1213 = vadd.f32 %v1211, %v1212
        %1214 = vst [vmem:[%s355] sm:$0x1] %v1213
        %s1215 = sand.u32 %s171, 1
        %s1216 = scalar_lea.sflag [#allocation4], %s1215
        %s1217 = sand.u32 %s171, 1
        %s1218 = scalar_lea.vmem [#allocation11], %s1217
        // Predicated region
        $region65: #{tpu_custom_call.1} parent=43 // pred_check
          %p1219 = pneg %p181
        $region66: #{tpu_custom_call.1} parent=43 // pred_check_branch
          %1221 = sbr.rel (%p1219) target = $region68
        $region67: #{tpu_custom_call.1} parent=43 // pred_region
          %1223 = vsyncadd %s1216, 0
          %s1224 = scalar_lea.hbm %s6, %s27
          %s1226 = sshll.u32 %s1218, 4
          %s1227 = int_to_ptr.vmem [resolvable:$true] %s1226
          %s1228 = sshll.u32 %s1224, 4
          %s1229 = int_to_ptr.hbm [resolvable:$true] %s1228
          %1231 = dma.vmem_to_hbm [thread:$0]  %s1227, 16, %s1229, %s1216
        $region68: #{tpu_custom_call.1} parent=43 // pred_fallthru
          _
      $region44: #{tpu_custom_call.1} parent=5 // pred_fallthru
        _
      %p1232 = scmp.le.s32.totalorder 2, %s22
      // Predicated region
      $region69: #{tpu_custom_call.1} parent=5 // pred_check
        %p1233 = pneg %p1232
      $region70: #{tpu_custom_call.1} parent=5 // pred_check_branch
        %1235 = sbr.rel (%p1233) target = $region72
      $region71: #{tpu_custom_call.1} parent=5 // pred_region
        %s1236 = ssub.s32 %s22, 2
        // Predicated region
        $region73: #{tpu_custom_call.1} parent=71 // pred_check
          %p1237 = pneg %p187
        $region74: #{tpu_custom_call.1} parent=71 // pred_check_branch
          %1239 = sbr.rel (%p1237) target = $region76
        $region75: #{tpu_custom_call.1} parent=71 // pred_region
          %s1240 = sand.u32 %s172, 1
          %s1241 = scalar_lea.sflag [#allocation4], %s1240
          %s1242 = sand.u32 %s172, 1
          %s1243 = scalar_lea.vmem [#allocation11], %s1242
          %1245 = dma.done %s1241, 16
        $region76: #{tpu_custom_call.1} parent=71 // pred_fallthru
          _
      $region72: #{tpu_custom_call.1} parent=5 // pred_fallthru
        _
    $region6: #{tpu_custom_call.1} parent=1 // loop_footer
      %s26 = sadd.s32 1, %s22
    $region7: #{tpu_custom_call.1} parent=1 // loop_footer_branch
      %21 = sbr.rel target = $region3
    $region8: #{tpu_custom_call.1} parent=1 // loop_exit
      _
    %1246 = vsyncpa [#allocation3], 1
    %s1247 = scalar_lea.sflag [#allocation3], 1
    %1248 = vsyncpa %s1247, 1
    %1249 = vsyncpa [#allocation6], 1
    %s1250 = scalar_lea.sflag [#allocation6], 1
    %1251 = vsyncpa %s1250, 1
    %1252 = vsyncpa [#allocation9], 1
    %1253 = vsyncpa [#allocation4], 1
    %s1254 = scalar_lea.sflag [#allocation4], 1
    %1255 = vsyncpa %s1254, 1

</llo_original>
